<compile_context>
chip_gen: v5e
topology: v5e:2x2
jax: 0.10.0
libtpu: 0.0.40
codegen_flags: <defaults>
</compile_context>

<pallas_src>
import functools

import jax
import jax.numpy as jnp
import numpy as np
from jax.experimental import pallas as pl
from jax.experimental.pallas import tpu as pltpu

EPS = 1e-5  # nn.LayerNorm default


# ---------------------------------------------------------------------------
# Kernel
# ---------------------------------------------------------------------------
def gene_importance_kernel(x_ref, gp_ref, w1_ref, hp_ref, w2_ref, o_ref):
    # x tile: (tm, G).  gp: (2, G) = [gw, b2].  hp: (3, H) = [b1', ln2_g, ln2_b].
    x = x_ref[...].astype(jnp.float32)
    inv_g = 1.0 / x.shape[-1]

    # --- LayerNorm(n_genes) statistics only (affine folded into w1'/b1') ---
    m1 = jnp.sum(x, axis=-1, keepdims=True) * inv_g
    m2 = jnp.sum(x * x, axis=-1, keepdims=True) * inv_g
    var = jnp.maximum(m2 - m1 * m1, 0.0)
    h = (x - m1) * jax.lax.rsqrt(var + EPS)

    # --- Linear(n_genes -> n_hidden): bf16 operands, f32 MXU accumulation ---
    hp = hp_ref[...]
    h = jnp.dot(h.astype(jnp.bfloat16), w1_ref[...],
                preferred_element_type=jnp.float32) + hp[0:1, :]

    # --- LayerNorm(n_hidden) ---
    inv_h = 1.0 / h.shape[-1]
    n1 = jnp.sum(h, axis=-1, keepdims=True) * inv_h
    n2 = jnp.sum(h * h, axis=-1, keepdims=True) * inv_h
    var2 = jnp.maximum(n2 - n1 * n1, 0.0)
    h = (h - n1) * jax.lax.rsqrt(var2 + EPS)
    h = h * hp[1:2, :] + hp[2:3, :]

    # --- ReLU (Dropout(0.1) is identity at inference) ---
    # TODO(synk): training-mode dropout (pltpu.prng_* stochastic mask) not implemented.
    h = jnp.maximum(h, 0.0)

    # --- Linear(n_hidden -> n_genes) + Sigmoid ---
    gp = gp_ref[...]
    ctx = jnp.dot(h.astype(jnp.bfloat16), w2_ref[...],
                  preferred_element_type=jnp.float32) + gp[1:2, :]
    ctx = jax.nn.sigmoid(ctx)

    # --- out = x * sigmoid(global_weights) * context ---
    # Re-read x from the resident VMEM tile instead of keeping the f32 copy
    # live across both matmuls (avoids spilling a full vreg-file worth of x).
    imp = jax.nn.sigmoid(gp[0:1, :]) * ctx
    o_ref[...] = (x_ref[...].astype(jnp.float32) * imp).astype(o_ref.dtype)


# ---------------------------------------------------------------------------
# Hardware probes / heuristics
# ---------------------------------------------------------------------------
_DEFAULT_VMEM_LIMIT = 64 * 1024 * 1024  # conservative; works on every gen


def _vmem_limit_bytes():
    """Generation-aware VMEM limit: physical capacity minus ~16 MiB headroom."""
    try:
        cap = int(pltpu.get_tpu_info().vmem_capacity_bytes)
        return max(32 * 1024 * 1024, cap - 16 * 1024 * 1024)
    except Exception:  # noqa: BLE001 - best-effort probe
        return _DEFAULT_VMEM_LIMIT


def _num_tensorcores():
    """Best-effort TensorCore-per-chip count (v7x = 2, earlier gens = 1)."""
    try:
        info = pltpu.get_tpu_info()
        for attr in ("num_cores", "tensorcore_count", "num_tensorcores"):
            n = getattr(info, attr, None)
            if n:
                return int(n)
    except Exception:  # noqa: BLE001
        pass
    try:
        kind = jax.devices()[0].device_kind.lower()
        if "v7" in kind or "7x" in kind:
            return 2
    except Exception:  # noqa: BLE001
        pass
    return 1


@functools.lru_cache(maxsize=None)
def _single_buffer_supported():
    """One-time capability probe for pl.Buffered(1) (single-buffered params)."""
    if not hasattr(pl, "Buffered"):
        return False

    def _copy(x_ref, o_ref):
        o_ref[...] = x_ref[...]

    try:
        fn = pl.pallas_call(
            _copy,
            out_shape=jax.ShapeDtypeStruct((8, 128), jnp.float32),
            grid=(1,),
            in_specs=[pl.BlockSpec((8, 128), lambda i: (0, 0),
                                   pipeline_mode=pl.Buffered(1))],
            out_specs=pl.BlockSpec((8, 128), lambda i: (0, 0)),
        )
        jax.jit(fn).lower(jax.ShapeDtypeStruct((8, 128), jnp.float32)).compile()
        return True
    except Exception:  # noqa: BLE001 - capability probe only
        return False


def _pick_tm(B, G, H, x_itemsize):
    """Largest batch tile that fits the VMEM budget, with enough grid steps
    to keep every TensorCore double-buffered."""
    n_cores = _num_tensorcores()
    budget = _vmem_limit_bytes()
    resident = 2 * G * H * 2                 # bf16 w1 + w2 (single-buffered)
    resident += 8 * (G + H) * 4 * 2          # packed small params (sublane-padded)
    avail = max(budget - resident - (4 << 20), 0)
    per_tm = 2 * 2 * G * x_itemsize          # (x + out) tiles, double-buffered
    tm_cap = max(8, avail // per_tm)
    # 2-core chips: >=4 steps (>=2 per core) and an even count; 1-core: >=2 steps.
    min_steps = 4 if n_cores >= 2 else 2
    for tm in (512, 256, 128, 64, 32, 16, 8):
        if B % tm:
            continue
        steps = B // tm
        if tm <= tm_cap and steps >= min_steps and (n_cores < 2 or steps % n_cores == 0):
            return tm
    for tm in (512, 256, 128, 64, 32, 16, 8):     # relax the step requirements
        if B % tm == 0 and tm <= tm_cap:
            return tm
    return B                                      # tiny / odd batch: one step


# ---------------------------------------------------------------------------
# Wrapper
# ---------------------------------------------------------------------------
def prepare_params(p):
    """Fold LN1's affine into Linear1 and cache bf16 weights + packed params.

    Call ONCE and reuse the result across forward calls (keeps the f32->bf16
    weight casts and the folding out of the hot path).
    """
    w1 = p["w1"].astype(jnp.float32)
    w1_folded = p["ln1_g"].reshape(-1, 1) * w1               # (G, H) row-scale
    b1_folded = p["b1"] + p["ln1_b"] @ w1                    # (1, H)
    gparams = jnp.concatenate([p["gw"], p["b2"]], axis=0)    # (2, G): gw, b2
    hparams = jnp.concatenate([b1_folded, p["ln2_g"], p["ln2_b"]], axis=0)  # (3, H)
    return {
        "w1_bf16": w1_folded.astype(jnp.bfloat16),
        "w2_bf16": p["w2"].astype(jnp.bfloat16),
        "gparams": gparams.astype(jnp.float32),
        "hparams": hparams.astype(jnp.float32),
    }


def _build_call(B, G, H, out_dtype, tm, *, donate_x, single_buffer):
    def param_spec(shape):
        # Parameters have a constant block index: keep one resident VMEM copy
        # instead of a double buffer when the Pallas version supports it.
        if single_buffer:
            return pl.BlockSpec(shape, lambda i: (0, 0), pipeline_mode=pl.Buffered(1))
        return pl.BlockSpec(shape, lambda i: (0, 0))

    in_specs = [
        pl.BlockSpec((tm, G), lambda i: (i, 0)),   # x
        param_spec((2, G)),                        # packed: gw, b2
        param_spec((G, H)),                        # w1 (bf16, LN1-folded)
        param_spec((3, H)),                        # packed: b1', ln2_g, ln2_b
        param_spec((H, G)),                        # w2 (bf16)
    ]
    return pl.pallas_call(
        gene_importance_kernel,
        out_shape=jax.ShapeDtypeStruct((B, G), out_dtype),
        grid_spec=pltpu.PrefetchScalarGridSpec(
            num_scalar_prefetch=0,
            grid=(B // tm,),
            in_specs=in_specs,
            out_specs=pl.BlockSpec((tm, G), lambda i: (i, 0)),
        ),
        input_output_aliases=({0: 0} if donate_x else {}),
        compiler_params=pltpu.CompilerParams(
            dimension_semantics=("parallel",),
            vmem_limit_bytes=_vmem_limit_bytes(),
        ),
    )


def gene_importance(x, prepared, *, tm=None, donate_x=False):
    """Forward pass.  `prepared` comes from prepare_params(params).

    donate_x=True aliases the output onto x's HBM buffer (destroys x).
    """
    B, G = x.shape
    H = prepared["w1_bf16"].shape[1]
    if tm is None:
        tm = _pick_tm(B, G, H, x.dtype.itemsize)
    assert B % tm == 0, (B, tm)
    call = _build_call(B, G, H, x.dtype, tm,
                       donate_x=donate_x,
                       single_buffer=_single_buffer_supported())
    return call(x, prepared["gparams"], prepared["w1_bf16"],
                prepared["hparams"], prepared["w2_bf16"])


# ---------------------------------------------------------------------------
# References & params
# ---------------------------------------------------------------------------
def reference_bf16(x, prepared):
    """Reference matching the kernel's numerics (folded LN1, bf16 matmuls)."""
    x32 = x.astype(jnp.float32)
    m1 = jnp.mean(x32, -1, keepdims=True)
    m2 = jnp.mean(x32 * x32, -1, keepdims=True)
    var = jnp.maximum(m2 - m1 * m1, 0.0)
    h = (x32 - m1) * jax.lax.rsqrt(var + EPS)
    hp, gp = prepared["hparams"], prepared["gparams"]
    h = jnp.dot(h.astype(jnp.bfloat16), prepared["w1_bf16"],
                preferred_element_type=jnp.float32) + hp[0:1]
    n1 = jnp.mean(h, -1, keepdims=True)
    n2 = jnp.mean(h * h, -1, keepdims=True)
    var2 = jnp.maximum(n2 - n1 * n1, 0.0)
    h = (h - n1) * jax.lax.rsqrt(var2 + EPS) * hp[1:2] + hp[2:3]
    h = jnp.maximum(h, 0.0)
    ctx = jax.nn.sigmoid(jnp.dot(h.astype(jnp.bfloat16), prepared["w2_bf16"],
                                 preferred_element_type=jnp.float32) + gp[1:2])
    return x32 * jax.nn.sigmoid(gp[0:1]) * ctx


def reference_f32(x, p):
    """Pure f32 reference matching the PyTorch module exactly."""
    x32 = x.astype(jnp.float32)
    mu = jnp.mean(x32, -1, keepdims=True)
    var = jnp.mean((x32 - mu) ** 2, -1, keepdims=True)
    h = (x32 - mu) * jax.lax.rsqrt(var + EPS) * p["ln1_g"] + p["ln1_b"]
    h = h @ p["w1"] + p["b1"]
    mu2 = jnp.mean(h, -1, keepdims=True)
    var2 = jnp.mean((h - mu2) ** 2, -1, keepdims=True)
    h = (h - mu2) * jax.lax.rsqrt(var2 + EPS) * p["ln2_g"] + p["ln2_b"]
    h = jnp.maximum(h, 0.0)
    ctx = jax.nn.sigmoid(h @ p["w2"] + p["b2"])
    return x32 * jax.nn.sigmoid(p["gw"]) * ctx


def init_params(key, n_genes, n_hidden):
    k1, k2, k3, k4 = jax.random.split(key, 4)
    lim1 = 1.0 / np.sqrt(n_genes)
    lim2 = 1.0 / np.sqrt(n_hidden)
    return {
        "gw": jnp.ones((1, n_genes), jnp.float32),   # nn.Parameter(torch.ones(n_genes))
        "ln1_g": jnp.ones((1, n_genes), jnp.float32),
        "ln1_b": jnp.zeros((1, n_genes), jnp.float32),
        "w1": jax.random.uniform(k1, (n_genes, n_hidden), jnp.float32, -lim1, lim1),
        "b1": jax.random.uniform(k2, (1, n_hidden), jnp.float32, -lim1, lim1),
        "ln2_g": jnp.ones((1, n_hidden), jnp.float32),
        "ln2_b": jnp.zeros((1, n_hidden), jnp.float32),
        "w2": jax.random.uniform(k3, (n_hidden, n_genes), jnp.float32, -lim2, lim2),
        "b2": jax.random.uniform(k4, (1, n_genes), jnp.float32, -lim2, lim2),
    }


if __name__ == "__main__":
    B, G, H = 256, 256, 128   # batch, n_genes, n_hidden
    key = jax.random.PRNGKey(0)
    kx, kp = jax.random.split(key)
    x = jax.random.normal(kx, (B, G), jnp.float32)
    params = init_params(kp, G, H)
    prepared = prepare_params(params)   # fold LN1 + cache bf16 weights, once

    ref_b = jax.block_until_ready(reference_bf16(x, prepared))
    ref_f = jax.block_until_ready(reference_f32(x, params))

    out = jax.block_until_ready(gene_importance(x, prepared))   # donate_x=False: x stays valid

    # Tight check against the kernel-numerics reference (bf16 matmuls, folded LN1).
    np.testing.assert_allclose(np.asarray(out), np.asarray(ref_b), rtol=2e-3, atol=2e-3)
    # Loose sanity check against the exact f32 PyTorch semantics.
    np.testing.assert_allclose(np.asarray(out), np.asarray(ref_f), rtol=5e-2, atol=5e-2)
    print("KERNEL_OK")
</pallas_src>

<mosaic_0001>
module attributes {stable_mosaic.version = 11 : i64} {
  func.func @gene_importance_kernel(%arg0: i32, %arg1: memref<128x256xf32, #tpu.memory_space<vmem>>, %arg2: memref<2x256xf32, #tpu.memory_space<vmem>>, %arg3: memref<256x128xbf16, #tpu.memory_space<vmem>>, %arg4: memref<3x128xf32, #tpu.memory_space<vmem>>, %arg5: memref<128x256xbf16, #tpu.memory_space<vmem>>, %arg6: memref<128x256xf32, #tpu.memory_space<vmem>>) attributes {dimension_semantics = [#tpu.dimension_semantics<parallel>], iteration_bounds = array<i64: 2>, scalar_prefetch = 0 : i64, scratch_operands = 0 : i64, tpu.core_type = #tpu.core_type<tc>, window_params = [{transform_indices = @transform_0, window_bounds = array<i64: 128, 256>}, {pipeline_mode = #tpu.pipeline_mode<synchronous>, transform_indices = @transform_1, window_bounds = array<i64: 2, 256>}, {pipeline_mode = #tpu.pipeline_mode<synchronous>, transform_indices = @transform_2, window_bounds = array<i64: 256, 128>}, {pipeline_mode = #tpu.pipeline_mode<synchronous>, transform_indices = @transform_3, window_bounds = array<i64: 3, 128>}, {pipeline_mode = #tpu.pipeline_mode<synchronous>, transform_indices = @transform_4, window_bounds = array<i64: 128, 256>}, {transform_indices = @transform_5, window_bounds = array<i64: 128, 256>}]} {
    %c0 = arith.constant 0 : index
    %c0_0 = arith.constant 0 : index
    %0 = vector.load %arg1[%c0, %c0_0] : memref<128x256xf32, #tpu.memory_space<vmem>>, vector<128x256xf32>
    %cst = arith.constant dense<0.000000e+00> : vector<128xf32>
    %1 = vector.multi_reduction <add>, %0, %cst [1] : vector<128x256xf32> to vector<128xf32>
    %2 = vector.shape_cast %1 : vector<128xf32> to vector<128x1xf32>
    %cst_1 = arith.constant 3.906250e-03 : f32
    %3 = vector.broadcast %cst_1 : f32 to vector<128x1xf32>
    %4 = arith.mulf %2, %3 : vector<128x1xf32>
    %5 = arith.mulf %0, %0 : vector<128x256xf32>
    %cst_2 = arith.constant dense<0.000000e+00> : vector<128xf32>
    %6 = vector.multi_reduction <add>, %5, %cst_2 [1] : vector<128x256xf32> to vector<128xf32>
    %7 = vector.shape_cast %6 : vector<128xf32> to vector<128x1xf32>
    %cst_3 = arith.constant 3.906250e-03 : f32
    %8 = vector.broadcast %cst_3 : f32 to vector<128x1xf32>
    %9 = arith.mulf %7, %8 : vector<128x1xf32>
    %10 = arith.mulf %4, %4 : vector<128x1xf32>
    %11 = arith.subf %9, %10 : vector<128x1xf32>
    %cst_4 = arith.constant 0.000000e+00 : f32
    %12 = vector.broadcast %cst_4 : f32 to vector<128x1xf32>
    %13 = arith.maximumf %11, %12 : vector<128x1xf32>
    %14 = vector.broadcast %4 : vector<128x1xf32> to vector<128x256xf32>
    %15 = arith.subf %0, %14 : vector<128x256xf32>
    %cst_5 = arith.constant 9.99999974E-6 : f32
    %16 = vector.broadcast %cst_5 : f32 to vector<128x1xf32>
    %17 = arith.addf %13, %16 : vector<128x1xf32>
    %18 = math.rsqrt %17 : vector<128x1xf32>
    %19 = vector.broadcast %18 : vector<128x1xf32> to vector<128x256xf32>
    %20 = arith.mulf %15, %19 : vector<128x256xf32>
    %c0_6 = arith.constant 0 : index
    %c0_7 = arith.constant 0 : index
    %21 = vector.load %arg4[%c0_6, %c0_7] : memref<3x128xf32, #tpu.memory_space<vmem>>, vector<3x128xf32>
    %22 = arith.truncf %20 : vector<128x256xf32> to vector<128x256xbf16>
    %c0_8 = arith.constant 0 : index
    %c0_9 = arith.constant 0 : index
    %23 = vector.load %arg3[%c0_8, %c0_9] : memref<256x128xbf16, #tpu.memory_space<vmem>>, vector<256x128xbf16>
    %cst_10 = arith.constant dense<0.000000e+00> : vector<128x128xf32>
    %24 = tpu.matmul %22, %23, %cst_10 {dimension_numbers = #tpu.dot_dimension_numbers<[1], [0], [0], [1], [0, 0, 1, 1], [], []>} : vector<128x256xbf16>, vector<256x128xbf16>, vector<128x128xf32> -> vector<128x128xf32>
    %25 = vector.extract_strided_slice %21 {offsets = [0, 0], sizes = [1, 128], strides = [1, 1]} : vector<3x128xf32> to vector<1x128xf32>
    %26 = vector.broadcast %25 : vector<1x128xf32> to vector<128x128xf32>
    %27 = arith.addf %24, %26 : vector<128x128xf32>
    %cst_11 = arith.constant dense<0.000000e+00> : vector<128xf32>
    %28 = vector.multi_reduction <add>, %27, %cst_11 [1] : vector<128x128xf32> to vector<128xf32>
    %29 = vector.shape_cast %28 : vector<128xf32> to vector<128x1xf32>
    %cst_12 = arith.constant 7.812500e-03 : f32
    %30 = vector.broadcast %cst_12 : f32 to vector<128x1xf32>
    %31 = arith.mulf %29, %30 : vector<128x1xf32>
    %32 = arith.mulf %27, %27 : vector<128x128xf32>
    %cst_13 = arith.constant dense<0.000000e+00> : vector<128xf32>
    %33 = vector.multi_reduction <add>, %32, %cst_13 [1] : vector<128x128xf32> to vector<128xf32>
    %34 = vector.shape_cast %33 : vector<128xf32> to vector<128x1xf32>
    %cst_14 = arith.constant 7.812500e-03 : f32
    %35 = vector.broadcast %cst_14 : f32 to vector<128x1xf32>
    %36 = arith.mulf %34, %35 : vector<128x1xf32>
    %37 = arith.mulf %31, %31 : vector<128x1xf32>
    %38 = arith.subf %36, %37 : vector<128x1xf32>
    %cst_15 = arith.constant 0.000000e+00 : f32
    %39 = vector.broadcast %cst_15 : f32 to vector<128x1xf32>
    %40 = arith.maximumf %38, %39 : vector<128x1xf32>
    %41 = vector.broadcast %31 : vector<128x1xf32> to vector<128x128xf32>
    %42 = arith.subf %27, %41 : vector<128x128xf32>
    %cst_16 = arith.constant 9.99999974E-6 : f32
    %43 = vector.broadcast %cst_16 : f32 to vector<128x1xf32>
    %44 = arith.addf %40, %43 : vector<128x1xf32>
    %45 = math.rsqrt %44 : vector<128x1xf32>
    %46 = vector.broadcast %45 : vector<128x1xf32> to vector<128x128xf32>
    %47 = arith.mulf %42, %46 : vector<128x128xf32>
    %48 = vector.extract_strided_slice %21 {offsets = [1, 0], sizes = [1, 128], strides = [1, 1]} : vector<3x128xf32> to vector<1x128xf32>
    %49 = vector.broadcast %48 : vector<1x128xf32> to vector<128x128xf32>
    %50 = arith.mulf %47, %49 : vector<128x128xf32>
    %51 = vector.extract_strided_slice %21 {offsets = [2, 0], sizes = [1, 128], strides = [1, 1]} : vector<3x128xf32> to vector<1x128xf32>
    %52 = vector.broadcast %51 : vector<1x128xf32> to vector<128x128xf32>
    %53 = arith.addf %50, %52 : vector<128x128xf32>
    %cst_17 = arith.constant 0.000000e+00 : f32
    %54 = vector.broadcast %cst_17 : f32 to vector<128x128xf32>
    %55 = arith.maximumf %53, %54 : vector<128x128xf32>
    %c0_18 = arith.constant 0 : index
    %c0_19 = arith.constant 0 : index
    %56 = vector.load %arg2[%c0_18, %c0_19] : memref<2x256xf32, #tpu.memory_space<vmem>>, vector<2x256xf32>
    %57 = arith.truncf %55 : vector<128x128xf32> to vector<128x128xbf16>
    %c0_20 = arith.constant 0 : index
    %c0_21 = arith.constant 0 : index
    %58 = vector.load %arg5[%c0_20, %c0_21] : memref<128x256xbf16, #tpu.memory_space<vmem>>, vector<128x256xbf16>
    %cst_22 = arith.constant dense<0.000000e+00> : vector<128x256xf32>
    %59 = tpu.matmul %57, %58, %cst_22 {dimension_numbers = #tpu.dot_dimension_numbers<[1], [0], [0], [1], [0, 0, 1, 1], [], []>} : vector<128x128xbf16>, vector<128x256xbf16>, vector<128x256xf32> -> vector<128x256xf32>
    %60 = vector.extract_strided_slice %56 {offsets = [1, 0], sizes = [1, 256], strides = [1, 1]} : vector<2x256xf32> to vector<1x256xf32>
    %61 = vector.broadcast %60 : vector<1x256xf32> to vector<128x256xf32>
    %62 = arith.addf %59, %61 : vector<128x256xf32>
    %63 = arith.negf %62 : vector<128x256xf32>
    %64 = math.exp %63 : vector<128x256xf32>
    %cst_23 = arith.constant 1.000000e+00 : f32
    %65 = vector.broadcast %cst_23 : f32 to vector<128x256xf32>
    %66 = arith.addf %65, %64 : vector<128x256xf32>
    %67 = arith.divf %65, %66 : vector<128x256xf32>
    %68 = vector.extract_strided_slice %56 {offsets = [0, 0], sizes = [1, 256], strides = [1, 1]} : vector<2x256xf32> to vector<1x256xf32>
    %69 = arith.negf %68 : vector<1x256xf32>
    %70 = math.exp %69 : vector<1x256xf32>
    %cst_24 = arith.constant 1.000000e+00 : f32
    %71 = vector.broadcast %cst_24 : f32 to vector<1x256xf32>
    %72 = arith.addf %71, %70 : vector<1x256xf32>
    %73 = arith.divf %71, %72 : vector<1x256xf32>
    %74 = vector.broadcast %73 : vector<1x256xf32> to vector<128x256xf32>
    %75 = arith.mulf %74, %67 : vector<128x256xf32>
    %c0_25 = arith.constant 0 : index
    %c0_26 = arith.constant 0 : index
    %76 = vector.load %arg1[%c0_25, %c0_26] : memref<128x256xf32, #tpu.memory_space<vmem>>, vector<128x256xf32>
    %77 = arith.mulf %76, %75 : vector<128x256xf32>
    %c0_27 = arith.constant 0 : index
    %c0_28 = arith.constant 0 : index
    %78 = vector.load %arg6[%c0_27, %c0_28] : memref<128x256xf32, #tpu.memory_space<vmem>>, vector<128x256xf32>
    tpu.vector_store %arg6[%c0_27, %c0_28], %77 {strides = array<i32>} : memref<128x256xf32, #tpu.memory_space<vmem>>, vector<128x256xf32>,
    return
  }
  func.func @transform_0(%arg0: i32) -> (i32, i32) {
    %c0_i32 = arith.constant 0 : i32
    %c0_i32_0 = arith.constant 0 : i32
    return %arg0, %c0_i32 : i32, i32
  }
  func.func @transform_1(%arg0: i32) -> (i32, i32) {
    %c0_i32 = arith.constant 0 : i32
    %c0_i32_0 = arith.constant 0 : i32
    %c0_i32_1 = arith.constant 0 : i32
    return %c0_i32, %c0_i32_0 : i32, i32
  }
  func.func @transform_2(%arg0: i32) -> (i32, i32) {
    %c0_i32 = arith.constant 0 : i32
    %c0_i32_0 = arith.constant 0 : i32
    %c0_i32_1 = arith.constant 0 : i32
    return %c0_i32, %c0_i32_0 : i32, i32
  }
  func.func @transform_3(%arg0: i32) -> (i32, i32) {
    %c0_i32 = arith.constant 0 : i32
    %c0_i32_0 = arith.constant 0 : i32
    %c0_i32_1 = arith.constant 0 : i32
    return %c0_i32, %c0_i32_0 : i32, i32
  }
  func.func @transform_4(%arg0: i32) -> (i32, i32) {
    %c0_i32 = arith.constant 0 : i32
    %c0_i32_0 = arith.constant 0 : i32
    %c0_i32_1 = arith.constant 0 : i32
    return %c0_i32, %c0_i32_0 : i32, i32
  }
  func.func @transform_5(%arg0: i32) -> (i32, i32) {
    %c0_i32 = arith.constant 0 : i32
    %c0_i32_0 = arith.constant 0 : i32
    return %arg0, %c0_i32 : i32, i32
  }
}

</mosaic_0001>

<llo_original>
// kernel: tpu_custom_call.1
$region0: #{tpu_custom_call.1}
  #allocation0 [shape = 'u32[]', space=smem, size = 0x4, offset = 0x4, fixed_abs, tag = 'smem constant byte address 0x4 - core index']
  #allocation1 [shape = 'u32[72,128]{1,0:T(1,128)}', space=vmem, size = 0x9000, scoped, tag = 'internal scratch']
  %s0 = inlined_call_operand.hbm [shape: f32[256,256], index: 0, kind: input, shape index: {}]
  %s1 = inlined_call_operand.hbm [shape: f32[2,256], index: 1, kind: input, shape index: {}]
  %s2 = inlined_call_operand.hbm [shape: bf16[256,128], index: 2, kind: input, shape index: {}]
  %s3 = inlined_call_operand.hbm [shape: f32[3,128], index: 3, kind: input, shape index: {}]
  %s4 = inlined_call_operand.hbm [shape: bf16[128,256], index: 4, kind: input, shape index: {}]
  %s5 = inlined_call_operand.hbm [shape: f32[256,256], index: 5, kind: output, shape index: {}]
  %s6 = sld [smem:[#allocation0]]
  $region73: #{tpu_custom_call.1} parent=0
    _
  %s8 = ssub.s32 1, %s6
  %s9 = scalar_select 0, %s8, %s6
  $region1: #{tpu_custom_call.1} parent=0
    #allocation2 [shape = 'u8[262144]{0}', space=vmem, size = 0x40000, scoped, tag = 'input window, operand 0']
    #allocation3 [shape = 's32[2]{0}', space=sflag, size = 0x8, scoped, tag = 'scoped memory for tpu_custom_call.1']
    #allocation4 [shape = 's32[2]{0}', space=sflag, size = 0x8, scoped, tag = 'scoped memory for tpu_custom_call.1']
    #allocation5 [shape = 'u8[2048]{0}', space=vmem, size = 0x800, scoped, tag = 'input window, operand 1, single buffered']
    #allocation6 [shape = 's32[1]{0}', space=sflag, size = 0x4, scoped, tag = 'scoped memory for tpu_custom_call.1']
    #allocation7 [shape = 'u8[65536]{0}', space=vmem, size = 0x10000, scoped, tag = 'input window, operand 2, single buffered']
    #allocation8 [shape = 'u8[2048]{0}', space=vmem, size = 0x800, scoped, tag = 'input window, operand 3, single buffered']
    #allocation9 [shape = 's32[1]{0}', space=sflag, size = 0x4, scoped, tag = 'scoped memory for tpu_custom_call.1']
    #allocation10 [shape = 'u8[65536]{0}', space=vmem, size = 0x10000, scoped, tag = 'input window, operand 4, single buffered']
    #allocation11 [shape = 'u8[262144]{0}', space=vmem, size = 0x40000, scoped, tag = 'output window, operand 0']
    %10 = vsyncpa [#allocation3], 0
    %s11 = scalar_lea.sflag [#allocation3], 1
    %12 = vsyncpa %s11, 0
    %13 = vsyncpa [#allocation6], 0
    %14 = vsyncpa [#allocation9], 0
    %15 = vsyncpa [#allocation4], 0
    %s16 = scalar_lea.sflag [#allocation4], 1
    %17 = vsyncpa %s16, 0
    loop: start=0, step=1, limit=4
    $region2: #{tpu_custom_call.1} parent=1 // loop_pre_header
      _
    $region3: #{tpu_custom_call.1} parent=1 // loop_header
      %s19 = sphi 0, %s23
      %p20 = scmp.ge.s32.totalorder %s19, 4
      %s29 = sphi 0, %s31
      %s32 = sphi 0, %s29
      %s33 = sphi 0, %s32
      %s49 = sphi 0, %s33
      %s53 = sphi 0, %s53
      %s55 = sphi 0, %s53
      %s56 = sphi 0, %s55
      %s70 = sphi 0, %s56
      %s74 = sphi 0, %s74
      %s76 = sphi 0, %s74
      %s77 = sphi 0, %s76
      %s91 = sphi 0, %s77
      %s95 = sphi 0, %s95
      %s97 = sphi 0, %s95
      %s98 = sphi 0, %s97
      %s112 = sphi 0, %s98
      %s116 = sphi 0, %s116
      %s118 = sphi 0, %s116
      %s119 = sphi 0, %s118
      %s133 = sphi 0, %s119
      %s139 = sphi 0, %s141
      %s142 = sphi 0, %s139
      %s143 = sphi 0, %s142
      %s159 = sphi 0, %s143
    $region4: #{tpu_custom_call.1} parent=1 // loop_header_branch
      %22 = sbr.rel (%p20) target = $region8
    $region5: #{tpu_custom_call.1} parent=1 // loop_body
      %s24 = ssub.s32 %s19, 1
      %s25 = ssub.s32 %s19, 2
      %s26 = sadd.s32 %s19, 1
      %s27 = ssub.s32 %s19, %s26
      %p28 = scmp.eq.s32.totalorder %s27, 0
      %s30 = sadd.s32 %s29, 1
      %s31 = scalar_select %p28, %s29, %s30
      %p34 = pneg %p28
      %p35 = scmp.eq.s32.totalorder %s19, 1
      %p36 = por %p34, %p35
      %p37 = scmp.ne.s32.totalorder %s29, %s32
      %p38 = scmp.eq.s32.totalorder %s19, 0
      %p39 = por %p37, %p38
      %p40 = scmp.ne.s32.totalorder %s29, %s32
      %p41 = scmp.eq.s32.totalorder %s24, 1
      %p42 = por %p40, %p41
      %p43 = scmp.ne.s32.totalorder %s32, %s33
      %p44 = scmp.eq.s32.totalorder %s24, 0
      %p45 = por %p43, %p44
      %p46 = scmp.ne.s32.totalorder %s32, %s33
      %p47 = scmp.eq.s32.totalorder %s25, 1
      %p48 = por %p46, %p47
      %p50 = scmp.ne.s32.totalorder %s33, %s49
      %p51 = scmp.eq.s32.totalorder %s25, 0
      %p52 = por %p50, %p51
      %s54 = sadd.s32 %s53, 1
      %p57 = scmp.eq.s32.totalorder %s19, 1
      %p58 = scmp.ne.s32.totalorder %s53, %s55
      %p59 = scmp.eq.s32.totalorder %s19, 0
      %p60 = por %p58, %p59
      %p61 = scmp.ne.s32.totalorder %s53, %s55
      %p62 = scmp.eq.s32.totalorder %s24, 1
      %p63 = por %p61, %p62
      %p64 = scmp.ne.s32.totalorder %s55, %s56
      %p65 = scmp.eq.s32.totalorder %s24, 0
      %p66 = por %p64, %p65
      %p67 = scmp.ne.s32.totalorder %s55, %s56
      %p68 = scmp.eq.s32.totalorder %s25, 1
      %p69 = por %p67, %p68
      %p71 = scmp.ne.s32.totalorder %s56, %s70
      %p72 = scmp.eq.s32.totalorder %s25, 0
      %p73 = por %p71, %p72
      %s75 = sadd.s32 %s74, 1
      %p78 = scmp.eq.s32.totalorder %s19, 1
      %p79 = scmp.ne.s32.totalorder %s74, %s76
      %p80 = scmp.eq.s32.totalorder %s19, 0
      %p81 = por %p79, %p80
      %p82 = scmp.ne.s32.totalorder %s74, %s76
      %p83 = scmp.eq.s32.totalorder %s24, 1
      %p84 = por %p82, %p83
      %p85 = scmp.ne.s32.totalorder %s76, %s77
      %p86 = scmp.eq.s32.totalorder %s24, 0
      %p87 = por %p85, %p86
      %p88 = scmp.ne.s32.totalorder %s76, %s77
      %p89 = scmp.eq.s32.totalorder %s25, 1
      %p90 = por %p88, %p89
      %p92 = scmp.ne.s32.totalorder %s77, %s91
      %p93 = scmp.eq.s32.totalorder %s25, 0
      %p94 = por %p92, %p93
      %s96 = sadd.s32 %s95, 1
      %p99 = scmp.eq.s32.totalorder %s19, 1
      %p100 = scmp.ne.s32.totalorder %s95, %s97
      %p101 = scmp.eq.s32.totalorder %s19, 0
      %p102 = por %p100, %p101
      %p103 = scmp.ne.s32.totalorder %s95, %s97
      %p104 = scmp.eq.s32.totalorder %s24, 1
      %p105 = por %p103, %p104
      %p106 = scmp.ne.s32.totalorder %s97, %s98
      %p107 = scmp.eq.s32.totalorder %s24, 0
      %p108 = por %p106, %p107
      %p109 = scmp.ne.s32.totalorder %s97, %s98
      %p110 = scmp.eq.s32.totalorder %s25, 1
      %p111 = por %p109, %p110
      %p113 = scmp.ne.s32.totalorder %s98, %s112
      %p114 = scmp.eq.s32.totalorder %s25, 0
      %p115 = por %p113, %p114
      %s117 = sadd.s32 %s116, 1
      %p120 = scmp.eq.s32.totalorder %s19, 1
      %p121 = scmp.ne.s32.totalorder %s116, %s118
      %p122 = scmp.eq.s32.totalorder %s19, 0
      %p123 = por %p121, %p122
      %p124 = scmp.ne.s32.totalorder %s116, %s118
      %p125 = scmp.eq.s32.totalorder %s24, 1
      %p126 = por %p124, %p125
      %p127 = scmp.ne.s32.totalorder %s118, %s119
      %p128 = scmp.eq.s32.totalorder %s24, 0
      %p129 = por %p127, %p128
      %p130 = scmp.ne.s32.totalorder %s118, %s119
      %p131 = scmp.eq.s32.totalorder %s25, 1
      %p132 = por %p130, %p131
      %p134 = scmp.ne.s32.totalorder %s119, %s133
      %p135 = scmp.eq.s32.totalorder %s25, 0
      %p136 = por %p134, %p135
      %s137 = ssub.s32 %s19, %s26
      %p138 = scmp.eq.s32.totalorder %s137, 0
      %s140 = sadd.s32 %s139, 1
      %s141 = scalar_select %p138, %s139, %s140
      %p144 = pneg %p138
      %p145 = scmp.eq.s32.totalorder %s19, 1
      %p146 = por %p144, %p145
      %p147 = scmp.ne.s32.totalorder %s139, %s142
      %p148 = scmp.eq.s32.totalorder %s19, 0
      %p149 = por %p147, %p148
      %p150 = scmp.ne.s32.totalorder %s139, %s142
      %p151 = scmp.eq.s32.totalorder %s24, 1
      %p152 = por %p150, %p151
      %p153 = scmp.ne.s32.totalorder %s142, %s143
      %p154 = scmp.eq.s32.totalorder %s24, 0
      %p155 = por %p153, %p154
      %p156 = scmp.ne.s32.totalorder %s142, %s143
      %p157 = scmp.eq.s32.totalorder %s25, 1
      %p158 = por %p156, %p157
      %p160 = scmp.ne.s32.totalorder %s143, %s159
      %p161 = scmp.eq.s32.totalorder %s25, 0
      %p162 = por %p160, %p161
      %p163 = scmp.le.s32.totalorder 1, %s19
      %p164 = scmp.lt.s32.totalorder %s19, 3
      %p165 = pnand %p163, %p164
      %p166 = pneg %p165
      // Predicated region
      $region9: #{tpu_custom_call.1} parent=5 // pred_check
        _
      $region10: #{tpu_custom_call.1} parent=5 // pred_check_branch
        %168 = sbr.rel (%p165) target = $region12
      $region11: #{tpu_custom_call.1} parent=5 // pred_region
        %s169 = ssub.s32 %s19, 1
        // Predicated region
        $region13: #{tpu_custom_call.1} parent=11 // pred_check
          %p170 = pneg %p66
        $region14: #{tpu_custom_call.1} parent=11 // pred_check_branch
          %172 = sbr.rel (%p170) target = $region16
        $region15: #{tpu_custom_call.1} parent=11 // pred_region
          %174 = vsyncadd [#allocation6], 0
          %s176 = sshll.u32 %s1, 4
          %s177 = int_to_ptr.hbm [resolvable:$true] %s176
          %s178 = sshll.u32 [#allocation5], 4
          %s179 = int_to_ptr.vmem [resolvable:$true] %s178
          %181 = dma.hbm_to_vmem [thread:$0]  %s177, 64, %s179, [#allocation6]
        $region16: #{tpu_custom_call.1} parent=11 // pred_fallthru
          _
        // Predicated region
        $region17: #{tpu_custom_call.1} parent=11 // pred_check
          %p182 = pneg %p87
        $region18: #{tpu_custom_call.1} parent=11 // pred_check_branch
          %184 = sbr.rel (%p182) target = $region20
        $region19: #{tpu_custom_call.1} parent=11 // pred_region
          %186 = vsyncadd [#allocation6], 0
          %s187 = sshll.u32 %s2, 4
          %s188 = int_to_ptr.hbm [resolvable:$true] %s187
          %s189 = sshll.u32 [#allocation7], 4
          %s190 = int_to_ptr.vmem [resolvable:$true] %s189
          %195 = dma.hbm_to_vmem [thread:$0]  %s188, 2048, %s190, [#allocation6], 64, 64, 4
        $region20: #{tpu_custom_call.1} parent=11 // pred_fallthru
          _
        // Predicated region
        $region21: #{tpu_custom_call.1} parent=11 // pred_check
          %p196 = pneg %p108
        $region22: #{tpu_custom_call.1} parent=11 // pred_check_branch
          %198 = sbr.rel (%p196) target = $region24
        $region23: #{tpu_custom_call.1} parent=11 // pred_region
          %200 = vsyncadd [#allocation9], 0
          %s202 = sshll.u32 %s3, 4
          %s203 = int_to_ptr.hbm [resolvable:$true] %s202
          %s204 = sshll.u32 [#allocation8], 4
          %s205 = int_to_ptr.vmem [resolvable:$true] %s204
          %207 = dma.hbm_to_vmem [thread:$0]  %s203, 64, %s205, [#allocation9]
        $region24: #{tpu_custom_call.1} parent=11 // pred_fallthru
          _
        // Predicated region
        $region25: #{tpu_custom_call.1} parent=11 // pred_check
          %p208 = pneg %p129
        $region26: #{tpu_custom_call.1} parent=11 // pred_check_branch
          %210 = sbr.rel (%p208) target = $region28
        $region27: #{tpu_custom_call.1} parent=11 // pred_region
          %212 = vsyncadd [#allocation9], 0
          %s213 = sshll.u32 %s4, 4
          %s214 = int_to_ptr.hbm [resolvable:$true] %s213
          %s215 = sshll.u32 [#allocation10], 4
          %s216 = int_to_ptr.vmem [resolvable:$true] %s215
          %221 = dma.hbm_to_vmem [thread:$0]  %s214, 2048, %s216, [#allocation9], 128, 128, 8
        $region28: #{tpu_custom_call.1} parent=11 // pred_fallthru
          _
      $region12: #{tpu_custom_call.1} parent=5 // pred_fallthru
        _
      %p222 = scmp.lt.s32.totalorder %s19, 2
      // Predicated region
      $region29: #{tpu_custom_call.1} parent=5 // pred_check
        %p223 = pneg %p222
      $region30: #{tpu_custom_call.1} parent=5 // pred_check_branch
        %225 = sbr.rel (%p223) target = $region32
      $region31: #{tpu_custom_call.1} parent=5 // pred_region
        // Predicated region
        $region33: #{tpu_custom_call.1} parent=31 // pred_check
          %p226 = pneg %p39
        $region34: #{tpu_custom_call.1} parent=31 // pred_check_branch
          %228 = sbr.rel (%p226) target = $region36
        $region35: #{tpu_custom_call.1} parent=31 // pred_region
          %s229 = sand.u32 %s29, 1
          %s230 = scalar_lea.sflag [#allocation3], %s229
          %s231 = sand.u32 %s29, 1
          %s232 = smul.addr %s231, 256
          %s233 = scalar_lea.vmem [#allocation2], %s232
          %s234 = smul.u32 16, %s19
          %236 = vsyncadd %s230, 0
          %s237 = smul.addr %s234, 2
          %s238 = smul.addr %s237, 8
          %s239 = scalar_lea.hbm %s0, %s238
          %s240 = sshll.u32 %s239, 4
          %s241 = int_to_ptr.hbm [resolvable:$true] %s240
          %s242 = sshll.u32 %s233, 4
          %s243 = int_to_ptr.vmem [resolvable:$true] %s242
          %248 = dma.hbm_to_vmem [thread:$0]  %s241, 4096, %s243, %s230, 256, 256, 16
        $region36: #{tpu_custom_call.1} parent=31 // pred_fallthru
          _
      $region32: #{tpu_custom_call.1} parent=5 // pred_fallthru
        _
      %p249 = scmp.le.s32.totalorder 1, %s19
      %p250 = scmp.lt.s32.totalorder %s19, 3
      %p251 = pnand %p249, %p250
      %p252 = pneg %p251
      // Predicated region
      $region37: #{tpu_custom_call.1} parent=5 // pred_check
        _
      $region38: #{tpu_custom_call.1} parent=5 // pred_check_branch
        %254 = sbr.rel (%p251) target = $region40
      $region39: #{tpu_custom_call.1} parent=5 // pred_region
        %s255 = ssub.s32 %s19, 1
        %s256 = sand.u32 %s32, 1
        %s257 = scalar_lea.sflag [#allocation3], %s256
        %s258 = sand.u32 %s32, 1
        %s259 = smul.addr %s258, 256
        %s260 = scalar_lea.vmem [#allocation2], %s259
        // Predicated region
        $region41: #{tpu_custom_call.1} parent=39 // pred_check
          %p261 = pneg %p45
        $region42: #{tpu_custom_call.1} parent=39 // pred_check_branch
          %263 = sbr.rel (%p261) target = $region44
        $region43: #{tpu_custom_call.1} parent=39 // pred_region
          %265 = dma.done %s257, 4096
        $region44: #{tpu_custom_call.1} parent=39 // pred_fallthru
          _
        // Predicated region
        $region45: #{tpu_custom_call.1} parent=39 // pred_check
          %p266 = pneg %p66
        $region46: #{tpu_custom_call.1} parent=39 // pred_check_branch
          %268 = sbr.rel (%p266) target = $region48
        $region47: #{tpu_custom_call.1} parent=39 // pred_region
          %270 = dma.done [#allocation6], 64
        $region48: #{tpu_custom_call.1} parent=39 // pred_fallthru
          _
        // Predicated region
        $region49: #{tpu_custom_call.1} parent=39 // pred_check
          %p271 = pneg %p87
        $region50: #{tpu_custom_call.1} parent=39 // pred_check_branch
          %273 = sbr.rel (%p271) target = $region52
        $region51: #{tpu_custom_call.1} parent=39 // pred_region
          %275 = dma.done [#allocation6], 2048
        $region52: #{tpu_custom_call.1} parent=39 // pred_fallthru
          _
        // Predicated region
        $region53: #{tpu_custom_call.1} parent=39 // pred_check
          %p276 = pneg %p108
        $region54: #{tpu_custom_call.1} parent=39 // pred_check_branch
          %278 = sbr.rel (%p276) target = $region56
        $region55: #{tpu_custom_call.1} parent=39 // pred_region
          %280 = dma.done [#allocation9], 64
        $region56: #{tpu_custom_call.1} parent=39 // pred_fallthru
          _
        // Predicated region
        $region57: #{tpu_custom_call.1} parent=39 // pred_check
          %p281 = pneg %p129
        $region58: #{tpu_custom_call.1} parent=39 // pred_check_branch
          %283 = sbr.rel (%p281) target = $region60
        $region59: #{tpu_custom_call.1} parent=39 // pred_region
          %285 = dma.done [#allocation9], 2048
        $region60: #{tpu_custom_call.1} parent=39 // pred_fallthru
          _
        %s286 = sand.u32 %s32, 1
        %s287 = scalar_lea.sflag [#allocation3], %s286
        %s288 = sand.u32 %s32, 1
        %s289 = smul.addr %s288, 256
        %s290 = scalar_lea.vmem [#allocation2], %s289
        %p291 = pneg %p45
        %p292 = pneg %p42
        %p293 = pneg %p66
        %p294 = pneg %p63
        %p295 = pneg %p87
        %p296 = pneg %p84
        %p297 = pneg %p108
        %p298 = pneg %p105
        %p299 = pneg %p129
        %p300 = pneg %p126
        %p301 = pneg %p155
        %p302 = pneg %p152
        %s303 = sand.u32 %s142, 1
        %s304 = scalar_lea.sflag [#allocation4], %s303
        %s305 = sand.u32 %s142, 1
        %s306 = smul.addr %s305, 256
        %s307 = scalar_lea.vmem [#allocation11], %s306
        %s308 = smul.u32 16, %s24
        %s309 = smul.u32 16, %s24
        %v310 = vld [vmem:[%s260] sm:$0xff]
        %v311 = vld [vmem:[%s260 + $0x8] sm:$0xff]
        %v312 = vld [vmem:[%s260 + $0x10] sm:$0xff]
        %v313 = vld [vmem:[%s260 + $0x18] sm:$0xff]
        %v314 = vld [vmem:[%s260 + $0x20] sm:$0xff]
        %v315 = vld [vmem:[%s260 + $0x28] sm:$0xff]
        %v316 = vld [vmem:[%s260 + $0x30] sm:$0xff]
        %v317 = vld [vmem:[%s260 + $0x38] sm:$0xff]
        %v318 = vld [vmem:[%s260 + $0x40] sm:$0xff]
        %v319 = vld [vmem:[%s260 + $0x48] sm:$0xff]
        %v320 = vld [vmem:[%s260 + $0x50] sm:$0xff]
        %v321 = vld [vmem:[%s260 + $0x58] sm:$0xff]
        %v322 = vld [vmem:[%s260 + $0x60] sm:$0xff]
        %v323 = vld [vmem:[%s260 + $0x68] sm:$0xff]
        %v324 = vld [vmem:[%s260 + $0x70] sm:$0xff]
        %v325 = vld [vmem:[%s260 + $0x78] sm:$0xff]
        %v326 = vld [vmem:[%s260 + $0x80] sm:$0xff]
        %v327 = vld [vmem:[%s260 + $0x88] sm:$0xff]
        %v328 = vld [vmem:[%s260 + $0x90] sm:$0xff]
        %v329 = vld [vmem:[%s260 + $0x98] sm:$0xff]
        %v330 = vld [vmem:[%s260 + $0xa0] sm:$0xff]
        %v331 = vld [vmem:[%s260 + $0xa8] sm:$0xff]
        %v332 = vld [vmem:[%s260 + $0xb0] sm:$0xff]
        %v333 = vld [vmem:[%s260 + $0xb8] sm:$0xff]
        %v334 = vld [vmem:[%s260 + $0xc0] sm:$0xff]
        %v335 = vld [vmem:[%s260 + $0xc8] sm:$0xff]
        %v336 = vld [vmem:[%s260 + $0xd0] sm:$0xff]
        %v337 = vld [vmem:[%s260 + $0xd8] sm:$0xff]
        %v338 = vld [vmem:[%s260 + $0xe0] sm:$0xff]
        %v339 = vld [vmem:[%s260 + $0xe8] sm:$0xff]
        %v340 = vld [vmem:[%s260 + $0xf0] sm:$0xff]
        %v341 = vld [vmem:[%s260 + $0xf8] sm:$0xff]
        %v342 = vadd.f32 %v310, %v311
        %343 = vadd.xlane.f32.xlu0 %v342
        %v344 = vpop.xlane.xlu0 %343
        %v345 = vadd.f32 %v312, %v313
        %346 = vadd.xlane.f32.xlu0 %v345
        %v347 = vpop.xlane.xlu0 %346
        %v348 = vadd.f32 %v314, %v315
        %349 = vadd.xlane.f32.xlu0 %v348
        %v350 = vpop.xlane.xlu0 %349
        %v351 = vadd.f32 %v316, %v317
        %352 = vadd.xlane.f32.xlu0 %v351
        %v353 = vpop.xlane.xlu0 %352
        %v354 = vadd.f32 %v318, %v319
        %355 = vadd.xlane.f32.xlu0 %v354
        %v356 = vpop.xlane.xlu0 %355
        %v357 = vadd.f32 %v320, %v321
        %358 = vadd.xlane.f32.xlu0 %v357
        %v359 = vpop.xlane.xlu0 %358
        %v360 = vadd.f32 %v322, %v323
        %361 = vadd.xlane.f32.xlu0 %v360
        %v362 = vpop.xlane.xlu0 %361
        %v363 = vadd.f32 %v324, %v325
        %364 = vadd.xlane.f32.xlu0 %v363
        %v365 = vpop.xlane.xlu0 %364
        %v366 = vadd.f32 %v326, %v327
        %367 = vadd.xlane.f32.xlu0 %v366
        %v368 = vpop.xlane.xlu0 %367
        %v369 = vadd.f32 %v328, %v329
        %370 = vadd.xlane.f32.xlu0 %v369
        %v371 = vpop.xlane.xlu0 %370
        %v372 = vadd.f32 %v330, %v331
        %373 = vadd.xlane.f32.xlu0 %v372
        %v374 = vpop.xlane.xlu0 %373
        %v375 = vadd.f32 %v332, %v333
        %376 = vadd.xlane.f32.xlu0 %v375
        %v377 = vpop.xlane.xlu0 %376
        %v378 = vadd.f32 %v334, %v335
        %379 = vadd.xlane.f32.xlu0 %v378
        %v380 = vpop.xlane.xlu0 %379
        %v381 = vadd.f32 %v336, %v337
        %382 = vadd.xlane.f32.xlu0 %v381
        %v383 = vpop.xlane.xlu0 %382
        %v384 = vadd.f32 %v338, %v339
        %385 = vadd.xlane.f32.xlu0 %v384
        %v386 = vpop.xlane.xlu0 %385
        %v387 = vadd.f32 %v340, %v341
        %388 = vadd.xlane.f32.xlu0 %v387
        %v389 = vpop.xlane.xlu0 %388
        %v390 = vmul.f32 %v344, 0.00390625
        %v391 = vmul.f32 %v347, 0.00390625
        %v392 = vmul.f32 %v350, 0.00390625
        %v393 = vmul.f32 %v353, 0.00390625
        %v394 = vmul.f32 %v356, 0.00390625
        %v395 = vmul.f32 %v359, 0.00390625
        %v396 = vmul.f32 %v362, 0.00390625
        %v397 = vmul.f32 %v365, 0.00390625
        %v398 = vmul.f32 %v368, 0.00390625
        %v399 = vmul.f32 %v371, 0.00390625
        %v400 = vmul.f32 %v374, 0.00390625
        %v401 = vmul.f32 %v377, 0.00390625
        %v402 = vmul.f32 %v380, 0.00390625
        %v403 = vmul.f32 %v383, 0.00390625
        %v404 = vmul.f32 %v386, 0.00390625
        %v405 = vmul.f32 %v389, 0.00390625
        %v406 = vmul.f32 %v310, %v310
        %v407 = vmul.f32 %v311, %v311
        %v408 = vmul.f32 %v312, %v312
        %v409 = vmul.f32 %v313, %v313
        %v410 = vmul.f32 %v314, %v314
        %v411 = vmul.f32 %v315, %v315
        %v412 = vmul.f32 %v316, %v316
        %v413 = vmul.f32 %v317, %v317
        %v414 = vmul.f32 %v318, %v318
        %v415 = vmul.f32 %v319, %v319
        %v416 = vmul.f32 %v320, %v320
        %v417 = vmul.f32 %v321, %v321
        %v418 = vmul.f32 %v322, %v322
        %v419 = vmul.f32 %v323, %v323
        %v420 = vmul.f32 %v324, %v324
        %v421 = vmul.f32 %v325, %v325
        %v422 = vmul.f32 %v326, %v326
        %v423 = vmul.f32 %v327, %v327
        %v424 = vmul.f32 %v328, %v328
        %v425 = vmul.f32 %v329, %v329
        %v426 = vmul.f32 %v330, %v330
        %v427 = vmul.f32 %v331, %v331
        %v428 = vmul.f32 %v332, %v332
        %v429 = vmul.f32 %v333, %v333
        %v430 = vmul.f32 %v334, %v334
        %v431 = vmul.f32 %v335, %v335
        %v432 = vmul.f32 %v336, %v336
        %v433 = vmul.f32 %v337, %v337
        %v434 = vmul.f32 %v338, %v338
        %v435 = vmul.f32 %v339, %v339
        %v436 = vmul.f32 %v340, %v340
        %v437 = vmul.f32 %v341, %v341
        %v438 = vadd.f32 %v406, %v407
        %439 = vadd.xlane.f32.xlu0 %v438
        %v440 = vpop.xlane.xlu0 %439
        %v441 = vadd.f32 %v408, %v409
        %442 = vadd.xlane.f32.xlu0 %v441
        %v443 = vpop.xlane.xlu0 %442
        %v444 = vadd.f32 %v410, %v411
        %445 = vadd.xlane.f32.xlu0 %v444
        %v446 = vpop.xlane.xlu0 %445
        %v447 = vadd.f32 %v412, %v413
        %448 = vadd.xlane.f32.xlu0 %v447
        %v449 = vpop.xlane.xlu0 %448
        %v450 = vadd.f32 %v414, %v415
        %451 = vadd.xlane.f32.xlu0 %v450
        %v452 = vpop.xlane.xlu0 %451
        %v453 = vadd.f32 %v416, %v417
        %454 = vadd.xlane.f32.xlu0 %v453
        %v455 = vpop.xlane.xlu0 %454
        %v456 = vadd.f32 %v418, %v419
        %457 = vadd.xlane.f32.xlu0 %v456
        %v458 = vpop.xlane.xlu0 %457
        %v459 = vadd.f32 %v420, %v421
        %460 = vadd.xlane.f32.xlu0 %v459
        %v461 = vpop.xlane.xlu0 %460
        %v462 = vadd.f32 %v422, %v423
        %463 = vadd.xlane.f32.xlu0 %v462
        %v464 = vpop.xlane.xlu0 %463
        %v465 = vadd.f32 %v424, %v425
        %466 = vadd.xlane.f32.xlu0 %v465
        %v467 = vpop.xlane.xlu0 %466
        %v468 = vadd.f32 %v426, %v427
        %469 = vadd.xlane.f32.xlu0 %v468
        %v470 = vpop.xlane.xlu0 %469
        %v471 = vadd.f32 %v428, %v429
        %472 = vadd.xlane.f32.xlu0 %v471
        %v473 = vpop.xlane.xlu0 %472
        %v474 = vadd.f32 %v430, %v431
        %475 = vadd.xlane.f32.xlu0 %v474
        %v476 = vpop.xlane.xlu0 %475
        %v477 = vadd.f32 %v432, %v433
        %478 = vadd.xlane.f32.xlu0 %v477
        %v479 = vpop.xlane.xlu0 %478
        %v480 = vadd.f32 %v434, %v435
        %481 = vadd.xlane.f32.xlu0 %v480
        %v482 = vpop.xlane.xlu0 %481
        %v483 = vadd.f32 %v436, %v437
        %484 = vadd.xlane.f32.xlu0 %v483
        %v485 = vpop.xlane.xlu0 %484
        %v486 = vmul.f32 %v440, 0.00390625
        %v487 = vmul.f32 %v443, 0.00390625
        %v488 = vmul.f32 %v446, 0.00390625
        %v489 = vmul.f32 %v449, 0.00390625
        %v490 = vmul.f32 %v452, 0.00390625
        %v491 = vmul.f32 %v455, 0.00390625
        %v492 = vmul.f32 %v458, 0.00390625
        %v493 = vmul.f32 %v461, 0.00390625
        %v494 = vmul.f32 %v464, 0.00390625
        %v495 = vmul.f32 %v467, 0.00390625
        %v496 = vmul.f32 %v470, 0.00390625
        %v497 = vmul.f32 %v473, 0.00390625
        %v498 = vmul.f32 %v476, 0.00390625
        %v499 = vmul.f32 %v479, 0.00390625
        %v500 = vmul.f32 %v482, 0.00390625
        %v501 = vmul.f32 %v485, 0.00390625
        %v502 = vmul.f32 %v390, %v390
        %v503 = vmul.f32 %v391, %v391
        %v504 = vmul.f32 %v392, %v392
        %v505 = vmul.f32 %v393, %v393
        %v506 = vmul.f32 %v394, %v394
        %v507 = vmul.f32 %v395, %v395
        %v508 = vmul.f32 %v396, %v396
        %v509 = vmul.f32 %v397, %v397
        %v510 = vmul.f32 %v398, %v398
        %v511 = vmul.f32 %v399, %v399
        %v512 = vmul.f32 %v400, %v400
        %v513 = vmul.f32 %v401, %v401
        %v514 = vmul.f32 %v402, %v402
        %v515 = vmul.f32 %v403, %v403
        %v516 = vmul.f32 %v404, %v404
        %v517 = vmul.f32 %v405, %v405
        %v518 = vsub.f32 %v486, %v502
        %v519 = vsub.f32 %v487, %v503
        %v520 = vsub.f32 %v488, %v504
        %v521 = vsub.f32 %v489, %v505
        %v522 = vsub.f32 %v490, %v506
        %v523 = vsub.f32 %v491, %v507
        %v524 = vsub.f32 %v492, %v508
        %v525 = vsub.f32 %v493, %v509
        %v526 = vsub.f32 %v494, %v510
        %v527 = vsub.f32 %v495, %v511
        %v528 = vsub.f32 %v496, %v512
        %v529 = vsub.f32 %v497, %v513
        %v530 = vsub.f32 %v498, %v514
        %v531 = vsub.f32 %v499, %v515
        %v532 = vsub.f32 %v500, %v516
        %v533 = vsub.f32 %v501, %v517
        %v534 = vmax.f32 %v518, 0.0
        %v535 = vmax.f32 %v519, 0.0
        %v536 = vmax.f32 %v520, 0.0
        %v537 = vmax.f32 %v521, 0.0
        %v538 = vmax.f32 %v522, 0.0
        %v539 = vmax.f32 %v523, 0.0
        %v540 = vmax.f32 %v524, 0.0
        %v541 = vmax.f32 %v525, 0.0
        %v542 = vmax.f32 %v526, 0.0
        %v543 = vmax.f32 %v527, 0.0
        %v544 = vmax.f32 %v528, 0.0
        %v545 = vmax.f32 %v529, 0.0
        %v546 = vmax.f32 %v530, 0.0
        %v547 = vmax.f32 %v531, 0.0
        %v548 = vmax.f32 %v532, 0.0
        %v549 = vmax.f32 %v533, 0.0
        %v550 = vsub.f32 %v310, %v390
        %v551 = vsub.f32 %v311, %v390
        %v552 = vsub.f32 %v312, %v391
        %v553 = vsub.f32 %v313, %v391
        %v554 = vsub.f32 %v314, %v392
        %v555 = vsub.f32 %v315, %v392
        %v556 = vsub.f32 %v316, %v393
        %v557 = vsub.f32 %v317, %v393
        %v558 = vsub.f32 %v318, %v394
        %v559 = vsub.f32 %v319, %v394
        %v560 = vsub.f32 %v320, %v395
        %v561 = vsub.f32 %v321, %v395
        %v562 = vsub.f32 %v322, %v396
        %v563 = vsub.f32 %v323, %v396
        %v564 = vsub.f32 %v324, %v397
        %v565 = vsub.f32 %v325, %v397
        %v566 = vsub.f32 %v326, %v398
        %v567 = vsub.f32 %v327, %v398
        %v568 = vsub.f32 %v328, %v399
        %v569 = vsub.f32 %v329, %v399
        %v570 = vsub.f32 %v330, %v400
        %v571 = vsub.f32 %v331, %v400
        %v572 = vsub.f32 %v332, %v401
        %v573 = vsub.f32 %v333, %v401
        %v574 = vsub.f32 %v334, %v402
        %v575 = vsub.f32 %v335, %v402
        %v576 = vsub.f32 %v336, %v403
        %v577 = vsub.f32 %v337, %v403
        %v578 = vsub.f32 %v338, %v404
        %v579 = vsub.f32 %v339, %v404
        %v580 = vsub.f32 %v340, %v405
        %v581 = vsub.f32 %v341, %v405
        %v582 = vadd.f32 %v534, 1e-05
        %v583 = vadd.f32 %v535, 1e-05
        %v584 = vadd.f32 %v536, 1e-05
        %v585 = vadd.f32 %v537, 1e-05
        %v586 = vadd.f32 %v538, 1e-05
        %v587 = vadd.f32 %v539, 1e-05
        %v588 = vadd.f32 %v540, 1e-05
        %v589 = vadd.f32 %v541, 1e-05
        %v590 = vadd.f32 %v542, 1e-05
        %v591 = vadd.f32 %v543, 1e-05
        %v592 = vadd.f32 %v544, 1e-05
        %v593 = vadd.f32 %v545, 1e-05
        %v594 = vadd.f32 %v546, 1e-05
        %v595 = vadd.f32 %v547, 1e-05
        %v596 = vadd.f32 %v548, 1e-05
        %v597 = vadd.f32 %v549, 1e-05
        %v598 = vrsqrt.pop %v582
        %v599 = vmul.f32 %v598, %v582
        %v600 = vmul.f32 %v599, %v598
        %v601 = vmul.f32 0.5, %v600
        %v602 = vsub.f32 1.5, %v601
        %v603 = vmul.f32 %v598, %v602
        %vm604 = vweird.f32 %v582
        %vm605 = vweird.f32 %v598
        %vm606 = vmor %vm604, %vm605
        %v607 = vsel %vm606, %v598, %v603
        %v608 = vrsqrt.pop %v583
        %v609 = vmul.f32 %v608, %v583
        %v610 = vmul.f32 %v609, %v608
        %v611 = vmul.f32 0.5, %v610
        %v612 = vsub.f32 1.5, %v611
        %v613 = vmul.f32 %v608, %v612
        %vm614 = vweird.f32 %v583
        %vm615 = vweird.f32 %v608
        %vm616 = vmor %vm614, %vm615
        %v617 = vsel %vm616, %v608, %v613
        %v618 = vrsqrt.pop %v584
        %v619 = vmul.f32 %v618, %v584
        %v620 = vmul.f32 %v619, %v618
        %v621 = vmul.f32 0.5, %v620
        %v622 = vsub.f32 1.5, %v621
        %v623 = vmul.f32 %v618, %v622
        %vm624 = vweird.f32 %v584
        %vm625 = vweird.f32 %v618
        %vm626 = vmor %vm624, %vm625
        %v627 = vsel %vm626, %v618, %v623
        %v628 = vrsqrt.pop %v585
        %v629 = vmul.f32 %v628, %v585
        %v630 = vmul.f32 %v629, %v628
        %v631 = vmul.f32 0.5, %v630
        %v632 = vsub.f32 1.5, %v631
        %v633 = vmul.f32 %v628, %v632
        %vm634 = vweird.f32 %v585
        %vm635 = vweird.f32 %v628
        %vm636 = vmor %vm634, %vm635
        %v637 = vsel %vm636, %v628, %v633
        %v638 = vrsqrt.pop %v586
        %v639 = vmul.f32 %v638, %v586
        %v640 = vmul.f32 %v639, %v638
        %v641 = vmul.f32 0.5, %v640
        %v642 = vsub.f32 1.5, %v641
        %v643 = vmul.f32 %v638, %v642
        %vm644 = vweird.f32 %v586
        %vm645 = vweird.f32 %v638
        %vm646 = vmor %vm644, %vm645
        %v647 = vsel %vm646, %v638, %v643
        %v648 = vrsqrt.pop %v587
        %v649 = vmul.f32 %v648, %v587
        %v650 = vmul.f32 %v649, %v648
        %v651 = vmul.f32 0.5, %v650
        %v652 = vsub.f32 1.5, %v651
        %v653 = vmul.f32 %v648, %v652
        %vm654 = vweird.f32 %v587
        %vm655 = vweird.f32 %v648
        %vm656 = vmor %vm654, %vm655
        %v657 = vsel %vm656, %v648, %v653
        %v658 = vrsqrt.pop %v588
        %v659 = vmul.f32 %v658, %v588
        %v660 = vmul.f32 %v659, %v658
        %v661 = vmul.f32 0.5, %v660
        %v662 = vsub.f32 1.5, %v661
        %v663 = vmul.f32 %v658, %v662
        %vm664 = vweird.f32 %v588
        %vm665 = vweird.f32 %v658
        %vm666 = vmor %vm664, %vm665
        %v667 = vsel %vm666, %v658, %v663
        %v668 = vrsqrt.pop %v589
        %v669 = vmul.f32 %v668, %v589
        %v670 = vmul.f32 %v669, %v668
        %v671 = vmul.f32 0.5, %v670
        %v672 = vsub.f32 1.5, %v671
        %v673 = vmul.f32 %v668, %v672
        %vm674 = vweird.f32 %v589
        %vm675 = vweird.f32 %v668
        %vm676 = vmor %vm674, %vm675
        %v677 = vsel %vm676, %v668, %v673
        %v678 = vrsqrt.pop %v590
        %v679 = vmul.f32 %v678, %v590
        %v680 = vmul.f32 %v679, %v678
        %v681 = vmul.f32 0.5, %v680
        %v682 = vsub.f32 1.5, %v681
        %v683 = vmul.f32 %v678, %v682
        %vm684 = vweird.f32 %v590
        %vm685 = vweird.f32 %v678
        %vm686 = vmor %vm684, %vm685
        %v687 = vsel %vm686, %v678, %v683
        %v688 = vrsqrt.pop %v591
        %v689 = vmul.f32 %v688, %v591
        %v690 = vmul.f32 %v689, %v688
        %v691 = vmul.f32 0.5, %v690
        %v692 = vsub.f32 1.5, %v691
        %v693 = vmul.f32 %v688, %v692
        %vm694 = vweird.f32 %v591
        %vm695 = vweird.f32 %v688
        %vm696 = vmor %vm694, %vm695
        %v697 = vsel %vm696, %v688, %v693
        %v698 = vrsqrt.pop %v592
        %v699 = vmul.f32 %v698, %v592
        %v700 = vmul.f32 %v699, %v698
        %v701 = vmul.f32 0.5, %v700
        %v702 = vsub.f32 1.5, %v701
        %v703 = vmul.f32 %v698, %v702
        %vm704 = vweird.f32 %v592
        %vm705 = vweird.f32 %v698
        %vm706 = vmor %vm704, %vm705
        %v707 = vsel %vm706, %v698, %v703
        %v708 = vrsqrt.pop %v593
        %v709 = vmul.f32 %v708, %v593
        %v710 = vmul.f32 %v709, %v708
        %v711 = vmul.f32 0.5, %v710
        %v712 = vsub.f32 1.5, %v711
        %v713 = vmul.f32 %v708, %v712
        %vm714 = vweird.f32 %v593
        %vm715 = vweird.f32 %v708
        %vm716 = vmor %vm714, %vm715
        %v717 = vsel %vm716, %v708, %v713
        %v718 = vrsqrt.pop %v594
        %v719 = vmul.f32 %v718, %v594
        %v720 = vmul.f32 %v719, %v718
        %v721 = vmul.f32 0.5, %v720
        %v722 = vsub.f32 1.5, %v721
        %v723 = vmul.f32 %v718, %v722
        %vm724 = vweird.f32 %v594
        %vm725 = vweird.f32 %v718
        %vm726 = vmor %vm724, %vm725
        %v727 = vsel %vm726, %v718, %v723
        %v728 = vrsqrt.pop %v595
        %v729 = vmul.f32 %v728, %v595
        %v730 = vmul.f32 %v729, %v728
        %v731 = vmul.f32 0.5, %v730
        %v732 = vsub.f32 1.5, %v731
        %v733 = vmul.f32 %v728, %v732
        %vm734 = vweird.f32 %v595
        %vm735 = vweird.f32 %v728
        %vm736 = vmor %vm734, %vm735
        %v737 = vsel %vm736, %v728, %v733
        %v738 = vrsqrt.pop %v596
        %v739 = vmul.f32 %v738, %v596
        %v740 = vmul.f32 %v739, %v738
        %v741 = vmul.f32 0.5, %v740
        %v742 = vsub.f32 1.5, %v741
        %v743 = vmul.f32 %v738, %v742
        %vm744 = vweird.f32 %v596
        %vm745 = vweird.f32 %v738
        %vm746 = vmor %vm744, %vm745
        %v747 = vsel %vm746, %v738, %v743
        %v748 = vrsqrt.pop %v597
        %v749 = vmul.f32 %v748, %v597
        %v750 = vmul.f32 %v749, %v748
        %v751 = vmul.f32 0.5, %v750
        %v752 = vsub.f32 1.5, %v751
        %v753 = vmul.f32 %v748, %v752
        %vm754 = vweird.f32 %v597
        %vm755 = vweird.f32 %v748
        %vm756 = vmor %vm754, %vm755
        %v757 = vsel %vm756, %v748, %v753
        %v758 = vmul.f32 %v550, %v607
        %v759 = vmul.f32 %v551, %v607
        %v760 = vmul.f32 %v552, %v617
        %v761 = vmul.f32 %v553, %v617
        %v762 = vmul.f32 %v554, %v627
        %v763 = vmul.f32 %v555, %v627
        %v764 = vmul.f32 %v556, %v637
        %v765 = vmul.f32 %v557, %v637
        %v766 = vmul.f32 %v558, %v647
        %v767 = vmul.f32 %v559, %v647
        %v768 = vmul.f32 %v560, %v657
        %v769 = vmul.f32 %v561, %v657
        %v770 = vmul.f32 %v562, %v667
        %v771 = vmul.f32 %v563, %v667
        %v772 = vmul.f32 %v564, %v677
        %v773 = vmul.f32 %v565, %v677
        %v774 = vmul.f32 %v566, %v687
        %v775 = vmul.f32 %v567, %v687
        %v776 = vmul.f32 %v568, %v697
        %v777 = vmul.f32 %v569, %v697
        %v778 = vmul.f32 %v570, %v707
        %v779 = vmul.f32 %v571, %v707
        %v780 = vmul.f32 %v572, %v717
        %v781 = vmul.f32 %v573, %v717
        %v782 = vmul.f32 %v574, %v727
        %v783 = vmul.f32 %v575, %v727
        %v784 = vmul.f32 %v576, %v737
        %v785 = vmul.f32 %v577, %v737
        %v786 = vmul.f32 %v578, %v747
        %v787 = vmul.f32 %v579, %v747
        %v788 = vmul.f32 %v580, %v757
        %v789 = vmul.f32 %v581, %v757
        %v790 = vld [vmem:[#allocation8] sm:$0x7]
        %v791 = vpack.c.bf16 %v760, %v758
        %v792 = vpack.c.bf16 %v761, %v759
        %v793 = vpack.c.bf16 %v764, %v762
        %v794 = vpack.c.bf16 %v765, %v763
        %v795 = vpack.c.bf16 %v768, %v766
        %v796 = vpack.c.bf16 %v769, %v767
        %v797 = vpack.c.bf16 %v772, %v770
        %v798 = vpack.c.bf16 %v773, %v771
        %v799 = vpack.c.bf16 %v776, %v774
        %v800 = vpack.c.bf16 %v777, %v775
        %v801 = vpack.c.bf16 %v780, %v778
        %v802 = vpack.c.bf16 %v781, %v779
        %v803 = vpack.c.bf16 %v784, %v782
        %v804 = vpack.c.bf16 %v785, %v783
        %v805 = vpack.c.bf16 %v788, %v786
        %v806 = vpack.c.bf16 %v789, %v787
        %v807 = vld [vmem:[#allocation7] sm:$0xf]
        %v808 = vld [vmem:[#allocation7 + $0x4] sm:$0xf]
        %v809 = vld [vmem:[#allocation7 + $0x8] sm:$0xf]
        %v810 = vld [vmem:[#allocation7 + $0xc] sm:$0xf]
        %v811 = vld [vmem:[#allocation7 + $0x10] sm:$0xf]
        %v812 = vld [vmem:[#allocation7 + $0x14] sm:$0xf]
        %v813 = vld [vmem:[#allocation7 + $0x18] sm:$0xf]
        %v814 = vld [vmem:[#allocation7 + $0x1c] sm:$0xf]
        %v815 = vld [vmem:[#allocation7 + $0x20] sm:$0xf]
        %v816 = vld [vmem:[#allocation7 + $0x24] sm:$0xf]
        %v817 = vld [vmem:[#allocation7 + $0x28] sm:$0xf]
        %v818 = vld [vmem:[#allocation7 + $0x2c] sm:$0xf]
        %v819 = vld [vmem:[#allocation7 + $0x30] sm:$0xf]
        %v820 = vld [vmem:[#allocation7 + $0x34] sm:$0xf]
        %v821 = vld [vmem:[#allocation7 + $0x38] sm:$0xf]
        %v822 = vld [vmem:[#allocation7 + $0x3c] sm:$0xf]
        %v823 = vld [vmem:[#allocation7 + $0x40] sm:$0xf]
        %v824 = vld [vmem:[#allocation7 + $0x44] sm:$0xf]
        %v825 = vld [vmem:[#allocation7 + $0x48] sm:$0xf]
        %v826 = vld [vmem:[#allocation7 + $0x4c] sm:$0xf]
        %v827 = vld [vmem:[#allocation7 + $0x50] sm:$0xf]
        %v828 = vld [vmem:[#allocation7 + $0x54] sm:$0xf]
        %v829 = vld [vmem:[#allocation7 + $0x58] sm:$0xf]
        %v830 = vld [vmem:[#allocation7 + $0x5c] sm:$0xf]
        %v831 = vld [vmem:[#allocation7 + $0x60] sm:$0xf]
        %v832 = vld [vmem:[#allocation7 + $0x64] sm:$0xf]
        %v833 = vld [vmem:[#allocation7 + $0x68] sm:$0xf]
        %v834 = vld [vmem:[#allocation7 + $0x6c] sm:$0xf]
        %v835 = vld [vmem:[#allocation7 + $0x70] sm:$0xf]
        %v836 = vld [vmem:[#allocation7 + $0x74] sm:$0xf]
        %v837 = vld [vmem:[#allocation7 + $0x78] sm:$0xf]
        %v838 = vld [vmem:[#allocation7 + $0x7c] sm:$0xf]
        %v839 = vperm.slane %v790, 0
        %v872 = vunpack.c.l.b16 %v807
        %v873 = vunpack.c.l.b16 %v808
        %v874 = vunpack.c.l.b16 %v809
        %v875 = vunpack.c.l.b16 %v810
        %v876 = vunpack.c.l.b16 %v811
        %v877 = vunpack.c.l.b16 %v812
        %v878 = vunpack.c.l.b16 %v813
        %v879 = vunpack.c.l.b16 %v814
        %v880 = vunpack.c.l.b16 %v815
        %v881 = vunpack.c.l.b16 %v816
        %v882 = vunpack.c.l.b16 %v817
        %v883 = vunpack.c.l.b16 %v818
        %v884 = vunpack.c.l.b16 %v819
        %v885 = vunpack.c.l.b16 %v820
        %v886 = vunpack.c.l.b16 %v821
        %v887 = vunpack.c.l.b16 %v822
        %v888 = vunpack.c.l.b16 %v823
        %v889 = vunpack.c.l.b16 %v824
        %v890 = vunpack.c.l.b16 %v825
        %v891 = vunpack.c.l.b16 %v826
        %v892 = vunpack.c.l.b16 %v827
        %v893 = vunpack.c.l.b16 %v828
        %v894 = vunpack.c.l.b16 %v829
        %v895 = vunpack.c.l.b16 %v830
        %v896 = vunpack.c.l.b16 %v831
        %v897 = vunpack.c.l.b16 %v832
        %v898 = vunpack.c.l.b16 %v833
        %v899 = vunpack.c.l.b16 %v834
        %v900 = vunpack.c.l.b16 %v835
        %v901 = vunpack.c.l.b16 %v836
        %v902 = vunpack.c.l.b16 %v837
        %v903 = vunpack.c.l.b16 %v838
        %v904 = vpack.c.b16 %v873, %v872
        %v905 = vpack.c.b16 %v875, %v874
        %v906 = vpack.c.b16 %v877, %v876
        %v907 = vpack.c.b16 %v879, %v878
        %v908 = vpack.c.b16 %v881, %v880
        %v909 = vpack.c.b16 %v883, %v882
        %v910 = vpack.c.b16 %v885, %v884
        %v911 = vpack.c.b16 %v887, %v886
        %v912 = vpack.c.b16 %v889, %v888
        %v913 = vpack.c.b16 %v891, %v890
        %v914 = vpack.c.b16 %v893, %v892
        %v915 = vpack.c.b16 %v895, %v894
        %v916 = vpack.c.b16 %v897, %v896
        %v917 = vpack.c.b16 %v899, %v898
        %v918 = vpack.c.b16 %v901, %v900
        %v919 = vpack.c.b16 %v903, %v902
        %936 = vmatpush.bf16.msra.mxu0 %v911
        %937 = vmatpush.bf16.msra.mxu0 %v910
        %938 = vmatpush.bf16.msra.mxu0 %v909
        %939 = vmatpush.bf16.msra.mxu0 %v908
        %940 = vmatpush.bf16.msra.mxu0 %v907
        %941 = vmatpush.bf16.msra.mxu0 %v906
        %942 = vmatpush.bf16.msra.mxu0 %v905
        %943 = vmatpush.bf16.msra.mxu0 %v904
        %944 = vmatmul.bf16.gmra.mxu0 %v791
        %v945 = vpop.f32.mrf.mxu0
        %v946 = vadd.f32 %v839, %v945
        %v947 = vpop.f32.mrf.mxu0
        %v948 = vadd.f32 %v839, %v947
        %949 = vmatmul.bf16.gmra.mxu0 %v793
        %v950 = vpop.f32.mrf.mxu0
        %v951 = vadd.f32 %v839, %v950
        %v952 = vpop.f32.mrf.mxu0
        %v953 = vadd.f32 %v839, %v952
        %954 = vmatmul.bf16.gmra.mxu0 %v795
        %v955 = vpop.f32.mrf.mxu0
        %v956 = vadd.f32 %v839, %v955
        %v957 = vpop.f32.mrf.mxu0
        %v958 = vadd.f32 %v839, %v957
        %959 = vmatmul.bf16.gmra.mxu0 %v797
        %v960 = vpop.f32.mrf.mxu0
        %v961 = vadd.f32 %v839, %v960
        %v962 = vpop.f32.mrf.mxu0
        %v963 = vadd.f32 %v839, %v962
        %964 = vmatmul.bf16.gmra.mxu0 %v799
        %v965 = vpop.f32.mrf.mxu0
        %v966 = vadd.f32 %v839, %v965
        %v967 = vpop.f32.mrf.mxu0
        %v968 = vadd.f32 %v839, %v967
        %969 = vmatmul.bf16.gmra.mxu0 %v801
        %v970 = vpop.f32.mrf.mxu0
        %v971 = vadd.f32 %v839, %v970
        %v972 = vpop.f32.mrf.mxu0
        %v973 = vadd.f32 %v839, %v972
        %974 = vmatmul.bf16.gmra.mxu0 %v803
        %v975 = vpop.f32.mrf.mxu0
        %v976 = vadd.f32 %v839, %v975
        %v977 = vpop.f32.mrf.mxu0
        %v978 = vadd.f32 %v839, %v977
        %979 = vmatmul.bf16.gmra.mxu0 %v805
        %v980 = vpop.f32.mrf.mxu0
        %v981 = vadd.f32 %v839, %v980
        %v982 = vpop.f32.mrf.mxu0
        %v983 = vadd.f32 %v839, %v982
        %984 = vdwg.mxu0
        %985 = vmatpush.bf16.msra.mxu0 %v919
        %986 = vmatpush.bf16.msra.mxu0 %v918
        %987 = vmatpush.bf16.msra.mxu0 %v917
        %988 = vmatpush.bf16.msra.mxu0 %v916
        %989 = vmatpush.bf16.msra.mxu0 %v915
        %990 = vmatpush.bf16.msra.mxu0 %v914
        %991 = vmatpush.bf16.msra.mxu0 %v913
        %992 = vmatpush.bf16.msra.mxu0 %v912
        %993 = vmatmul.bf16.gmra.mxu0 %v792
        %v994 = vpop.f32.mrf.mxu0
        %v995 = vadd.f32 %v946, %v994
        %v996 = vpop.f32.mrf.mxu0
        %v997 = vadd.f32 %v948, %v996
        %998 = vmatmul.bf16.gmra.mxu0 %v794
        %v999 = vpop.f32.mrf.mxu0
        %v1000 = vadd.f32 %v951, %v999
        %v1001 = vpop.f32.mrf.mxu0
        %v1002 = vadd.f32 %v953, %v1001
        %1003 = vmatmul.bf16.gmra.mxu0 %v796
        %v1004 = vpop.f32.mrf.mxu0
        %v1005 = vadd.f32 %v956, %v1004
        %v1006 = vpop.f32.mrf.mxu0
        %v1007 = vadd.f32 %v958, %v1006
        %1008 = vmatmul.bf16.gmra.mxu0 %v798
        %v1009 = vpop.f32.mrf.mxu0
        %v1010 = vadd.f32 %v961, %v1009
        %v1011 = vpop.f32.mrf.mxu0
        %v1012 = vadd.f32 %v963, %v1011
        %1013 = vmatmul.bf16.gmra.mxu0 %v800
        %v1014 = vpop.f32.mrf.mxu0
        %v1015 = vadd.f32 %v966, %v1014
        %v1016 = vpop.f32.mrf.mxu0
        %v1017 = vadd.f32 %v968, %v1016
        %1018 = vmatmul.bf16.gmra.mxu0 %v802
        %v1019 = vpop.f32.mrf.mxu0
        %v1020 = vadd.f32 %v971, %v1019
        %v1021 = vpop.f32.mrf.mxu0
        %v1022 = vadd.f32 %v973, %v1021
        %1023 = vmatmul.bf16.gmra.mxu0 %v804
        %v1024 = vpop.f32.mrf.mxu0
        %v1025 = vadd.f32 %v976, %v1024
        %v1026 = vpop.f32.mrf.mxu0
        %v1027 = vadd.f32 %v978, %v1026
        %1028 = vmatmul.bf16.gmra.mxu0 %v806
        %v1029 = vpop.f32.mrf.mxu0
        %v1030 = vadd.f32 %v981, %v1029
        %v1031 = vpop.f32.mrf.mxu0
        %v1032 = vadd.f32 %v983, %v1031
        %1033 = vdwg.mxu0
        %1034 = vadd.xlane.f32.xlu0 %v995
        %v1035 = vpop.xlane.xlu0 %1034
        %1036 = vadd.xlane.f32.xlu0 %v997
        %v1037 = vpop.xlane.xlu0 %1036
        %1038 = vadd.xlane.f32.xlu0 %v1000
        %v1039 = vpop.xlane.xlu0 %1038
        %1040 = vadd.xlane.f32.xlu0 %v1002
        %v1041 = vpop.xlane.xlu0 %1040
        %1042 = vadd.xlane.f32.xlu0 %v1005
        %v1043 = vpop.xlane.xlu0 %1042
        %1044 = vadd.xlane.f32.xlu0 %v1007
        %v1045 = vpop.xlane.xlu0 %1044
        %1046 = vadd.xlane.f32.xlu0 %v1010
        %v1047 = vpop.xlane.xlu0 %1046
        %1048 = vadd.xlane.f32.xlu0 %v1012
        %v1049 = vpop.xlane.xlu0 %1048
        %1050 = vadd.xlane.f32.xlu0 %v1015
        %v1051 = vpop.xlane.xlu0 %1050
        %1052 = vadd.xlane.f32.xlu0 %v1017
        %v1053 = vpop.xlane.xlu0 %1052
        %1054 = vadd.xlane.f32.xlu0 %v1020
        %v1055 = vpop.xlane.xlu0 %1054
        %1056 = vadd.xlane.f32.xlu0 %v1022
        %v1057 = vpop.xlane.xlu0 %1056
        %1058 = vadd.xlane.f32.xlu0 %v1025
        %v1059 = vpop.xlane.xlu0 %1058
        %1060 = vadd.xlane.f32.xlu0 %v1027
        %v1061 = vpop.xlane.xlu0 %1060
        %1062 = vadd.xlane.f32.xlu0 %v1030
        %v1063 = vpop.xlane.xlu0 %1062
        %1064 = vadd.xlane.f32.xlu0 %v1032
        %v1065 = vpop.xlane.xlu0 %1064
        %v1066 = vmul.f32 %v1035, 0.0078125
        %v1067 = vmul.f32 %v1037, 0.0078125
        %v1068 = vmul.f32 %v1039, 0.0078125
        %v1069 = vmul.f32 %v1041, 0.0078125
        %v1070 = vmul.f32 %v1043, 0.0078125
        %v1071 = vmul.f32 %v1045, 0.0078125
        %v1072 = vmul.f32 %v1047, 0.0078125
        %v1073 = vmul.f32 %v1049, 0.0078125
        %v1074 = vmul.f32 %v1051, 0.0078125
        %v1075 = vmul.f32 %v1053, 0.0078125
        %v1076 = vmul.f32 %v1055, 0.0078125
        %v1077 = vmul.f32 %v1057, 0.0078125
        %v1078 = vmul.f32 %v1059, 0.0078125
        %v1079 = vmul.f32 %v1061, 0.0078125
        %v1080 = vmul.f32 %v1063, 0.0078125
        %v1081 = vmul.f32 %v1065, 0.0078125
        %v1082 = vmul.f32 %v995, %v995
        %v1083 = vmul.f32 %v997, %v997
        %v1084 = vmul.f32 %v1000, %v1000
        %v1085 = vmul.f32 %v1002, %v1002
        %v1086 = vmul.f32 %v1005, %v1005
        %v1087 = vmul.f32 %v1007, %v1007
        %v1088 = vmul.f32 %v1010, %v1010
        %v1089 = vmul.f32 %v1012, %v1012
        %v1090 = vmul.f32 %v1015, %v1015
        %v1091 = vmul.f32 %v1017, %v1017
        %v1092 = vmul.f32 %v1020, %v1020
        %v1093 = vmul.f32 %v1022, %v1022
        %v1094 = vmul.f32 %v1025, %v1025
        %v1095 = vmul.f32 %v1027, %v1027
        %v1096 = vmul.f32 %v1030, %v1030
        %v1097 = vmul.f32 %v1032, %v1032
        %1098 = vadd.xlane.f32.xlu0 %v1082
        %v1099 = vpop.xlane.xlu0 %1098
        %1100 = vadd.xlane.f32.xlu0 %v1083
        %v1101 = vpop.xlane.xlu0 %1100
        %1102 = vadd.xlane.f32.xlu0 %v1084
        %v1103 = vpop.xlane.xlu0 %1102
        %1104 = vadd.xlane.f32.xlu0 %v1085
        %v1105 = vpop.xlane.xlu0 %1104
        %1106 = vadd.xlane.f32.xlu0 %v1086
        %v1107 = vpop.xlane.xlu0 %1106
        %1108 = vadd.xlane.f32.xlu0 %v1087
        %v1109 = vpop.xlane.xlu0 %1108
        %1110 = vadd.xlane.f32.xlu0 %v1088
        %v1111 = vpop.xlane.xlu0 %1110
        %1112 = vadd.xlane.f32.xlu0 %v1089
        %v1113 = vpop.xlane.xlu0 %1112
        %1114 = vadd.xlane.f32.xlu0 %v1090
        %v1115 = vpop.xlane.xlu0 %1114
        %1116 = vadd.xlane.f32.xlu0 %v1091
        %v1117 = vpop.xlane.xlu0 %1116
        %1118 = vadd.xlane.f32.xlu0 %v1092
        %v1119 = vpop.xlane.xlu0 %1118
        %1120 = vadd.xlane.f32.xlu0 %v1093
        %v1121 = vpop.xlane.xlu0 %1120
        %1122 = vadd.xlane.f32.xlu0 %v1094
        %v1123 = vpop.xlane.xlu0 %1122
        %1124 = vadd.xlane.f32.xlu0 %v1095
        %v1125 = vpop.xlane.xlu0 %1124
        %1126 = vadd.xlane.f32.xlu0 %v1096
        %v1127 = vpop.xlane.xlu0 %1126
        %1128 = vadd.xlane.f32.xlu0 %v1097
        %v1129 = vpop.xlane.xlu0 %1128
        %v1130 = vmul.f32 %v1099, 0.0078125
        %v1131 = vmul.f32 %v1101, 0.0078125
        %v1132 = vmul.f32 %v1103, 0.0078125
        %v1133 = vmul.f32 %v1105, 0.0078125
        %v1134 = vmul.f32 %v1107, 0.0078125
        %v1135 = vmul.f32 %v1109, 0.0078125
        %v1136 = vmul.f32 %v1111, 0.0078125
        %v1137 = vmul.f32 %v1113, 0.0078125
        %v1138 = vmul.f32 %v1115, 0.0078125
        %v1139 = vmul.f32 %v1117, 0.0078125
        %v1140 = vmul.f32 %v1119, 0.0078125
        %v1141 = vmul.f32 %v1121, 0.0078125
        %v1142 = vmul.f32 %v1123, 0.0078125
        %v1143 = vmul.f32 %v1125, 0.0078125
        %v1144 = vmul.f32 %v1127, 0.0078125
        %v1145 = vmul.f32 %v1129, 0.0078125
        %v1146 = vmul.f32 %v1066, %v1066
        %v1147 = vmul.f32 %v1067, %v1067
        %v1148 = vmul.f32 %v1068, %v1068
        %v1149 = vmul.f32 %v1069, %v1069
        %v1150 = vmul.f32 %v1070, %v1070
        %v1151 = vmul.f32 %v1071, %v1071
        %v1152 = vmul.f32 %v1072, %v1072
        %v1153 = vmul.f32 %v1073, %v1073
        %v1154 = vmul.f32 %v1074, %v1074
        %v1155 = vmul.f32 %v1075, %v1075
        %v1156 = vmul.f32 %v1076, %v1076
        %v1157 = vmul.f32 %v1077, %v1077
        %v1158 = vmul.f32 %v1078, %v1078
        %v1159 = vmul.f32 %v1079, %v1079
        %v1160 = vmul.f32 %v1080, %v1080
        %v1161 = vmul.f32 %v1081, %v1081
        %v1162 = vsub.f32 %v1130, %v1146
        %v1163 = vsub.f32 %v1131, %v1147
        %v1164 = vsub.f32 %v1132, %v1148
        %v1165 = vsub.f32 %v1133, %v1149
        %v1166 = vsub.f32 %v1134, %v1150
        %v1167 = vsub.f32 %v1135, %v1151
        %v1168 = vsub.f32 %v1136, %v1152
        %v1169 = vsub.f32 %v1137, %v1153
        %v1170 = vsub.f32 %v1138, %v1154
        %v1171 = vsub.f32 %v1139, %v1155
        %v1172 = vsub.f32 %v1140, %v1156
        %v1173 = vsub.f32 %v1141, %v1157
        %v1174 = vsub.f32 %v1142, %v1158
        %v1175 = vsub.f32 %v1143, %v1159
        %v1176 = vsub.f32 %v1144, %v1160
        %v1177 = vsub.f32 %v1145, %v1161
        %v1178 = vmax.f32 %v1162, 0.0
        %v1179 = vmax.f32 %v1163, 0.0
        %v1180 = vmax.f32 %v1164, 0.0
        %v1181 = vmax.f32 %v1165, 0.0
        %v1182 = vmax.f32 %v1166, 0.0
        %v1183 = vmax.f32 %v1167, 0.0
        %v1184 = vmax.f32 %v1168, 0.0
        %v1185 = vmax.f32 %v1169, 0.0
        %v1186 = vmax.f32 %v1170, 0.0
        %v1187 = vmax.f32 %v1171, 0.0
        %v1188 = vmax.f32 %v1172, 0.0
        %v1189 = vmax.f32 %v1173, 0.0
        %v1190 = vmax.f32 %v1174, 0.0
        %v1191 = vmax.f32 %v1175, 0.0
        %v1192 = vmax.f32 %v1176, 0.0
        %v1193 = vmax.f32 %v1177, 0.0
        %v1194 = vsub.f32 %v995, %v1066
        %v1195 = vsub.f32 %v997, %v1067
        %v1196 = vsub.f32 %v1000, %v1068
        %v1197 = vsub.f32 %v1002, %v1069
        %v1198 = vsub.f32 %v1005, %v1070
        %v1199 = vsub.f32 %v1007, %v1071
        %v1200 = vsub.f32 %v1010, %v1072
        %v1201 = vsub.f32 %v1012, %v1073
        %v1202 = vsub.f32 %v1015, %v1074
        %v1203 = vsub.f32 %v1017, %v1075
        %v1204 = vsub.f32 %v1020, %v1076
        %v1205 = vsub.f32 %v1022, %v1077
        %v1206 = vsub.f32 %v1025, %v1078
        %v1207 = vsub.f32 %v1027, %v1079
        %v1208 = vsub.f32 %v1030, %v1080
        %v1209 = vsub.f32 %v1032, %v1081
        %v1210 = vadd.f32 %v1178, 1e-05
        %v1211 = vadd.f32 %v1179, 1e-05
        %v1212 = vadd.f32 %v1180, 1e-05
        %v1213 = vadd.f32 %v1181, 1e-05
        %v1214 = vadd.f32 %v1182, 1e-05
        %v1215 = vadd.f32 %v1183, 1e-05
        %v1216 = vadd.f32 %v1184, 1e-05
        %v1217 = vadd.f32 %v1185, 1e-05
        %v1218 = vadd.f32 %v1186, 1e-05
        %v1219 = vadd.f32 %v1187, 1e-05
        %v1220 = vadd.f32 %v1188, 1e-05
        %v1221 = vadd.f32 %v1189, 1e-05
        %v1222 = vadd.f32 %v1190, 1e-05
        %v1223 = vadd.f32 %v1191, 1e-05
        %v1224 = vadd.f32 %v1192, 1e-05
        %v1225 = vadd.f32 %v1193, 1e-05
        %v1226 = vrsqrt.pop %v1210
        %v1227 = vmul.f32 %v1226, %v1210
        %v1228 = vmul.f32 %v1227, %v1226
        %v1229 = vmul.f32 0.5, %v1228
        %v1230 = vsub.f32 1.5, %v1229
        %v1231 = vmul.f32 %v1226, %v1230
        %vm1232 = vweird.f32 %v1210
        %vm1233 = vweird.f32 %v1226
        %vm1234 = vmor %vm1232, %vm1233
        %v1235 = vsel %vm1234, %v1226, %v1231
        %v1236 = vrsqrt.pop %v1211
        %v1237 = vmul.f32 %v1236, %v1211
        %v1238 = vmul.f32 %v1237, %v1236
        %v1239 = vmul.f32 0.5, %v1238
        %v1240 = vsub.f32 1.5, %v1239
        %v1241 = vmul.f32 %v1236, %v1240
        %vm1242 = vweird.f32 %v1211
        %vm1243 = vweird.f32 %v1236
        %vm1244 = vmor %vm1242, %vm1243
        %v1245 = vsel %vm1244, %v1236, %v1241
        %v1246 = vrsqrt.pop %v1212
        %v1247 = vmul.f32 %v1246, %v1212
        %v1248 = vmul.f32 %v1247, %v1246
        %v1249 = vmul.f32 0.5, %v1248
        %v1250 = vsub.f32 1.5, %v1249
        %v1251 = vmul.f32 %v1246, %v1250
        %vm1252 = vweird.f32 %v1212
        %vm1253 = vweird.f32 %v1246
        %vm1254 = vmor %vm1252, %vm1253
        %v1255 = vsel %vm1254, %v1246, %v1251
        %v1256 = vrsqrt.pop %v1213
        %v1257 = vmul.f32 %v1256, %v1213
        %v1258 = vmul.f32 %v1257, %v1256
        %v1259 = vmul.f32 0.5, %v1258
        %v1260 = vsub.f32 1.5, %v1259
        %v1261 = vmul.f32 %v1256, %v1260
        %vm1262 = vweird.f32 %v1213
        %vm1263 = vweird.f32 %v1256
        %vm1264 = vmor %vm1262, %vm1263
        %v1265 = vsel %vm1264, %v1256, %v1261
        %v1266 = vrsqrt.pop %v1214
        %v1267 = vmul.f32 %v1266, %v1214
        %v1268 = vmul.f32 %v1267, %v1266
        %v1269 = vmul.f32 0.5, %v1268
        %v1270 = vsub.f32 1.5, %v1269
        %v1271 = vmul.f32 %v1266, %v1270
        %vm1272 = vweird.f32 %v1214
        %vm1273 = vweird.f32 %v1266
        %vm1274 = vmor %vm1272, %vm1273
        %v1275 = vsel %vm1274, %v1266, %v1271
        %v1276 = vrsqrt.pop %v1215
        %v1277 = vmul.f32 %v1276, %v1215
        %v1278 = vmul.f32 %v1277, %v1276
        %v1279 = vmul.f32 0.5, %v1278
        %v1280 = vsub.f32 1.5, %v1279
        %v1281 = vmul.f32 %v1276, %v1280
        %vm1282 = vweird.f32 %v1215
        %vm1283 = vweird.f32 %v1276
        %vm1284 = vmor %vm1282, %vm1283
        %v1285 = vsel %vm1284, %v1276, %v1281
        %v1286 = vrsqrt.pop %v1216
        %v1287 = vmul.f32 %v1286, %v1216
        %v1288 = vmul.f32 %v1287, %v1286
        %v1289 = vmul.f32 0.5, %v1288
        %v1290 = vsub.f32 1.5, %v1289
        %v1291 = vmul.f32 %v1286, %v1290
        %vm1292 = vweird.f32 %v1216
        %vm1293 = vweird.f32 %v1286
        %vm1294 = vmor %vm1292, %vm1293
        %v1295 = vsel %vm1294, %v1286, %v1291
        %v1296 = vrsqrt.pop %v1217
        %v1297 = vmul.f32 %v1296, %v1217
        %v1298 = vmul.f32 %v1297, %v1296
        %v1299 = vmul.f32 0.5, %v1298
        %v1300 = vsub.f32 1.5, %v1299
        %v1301 = vmul.f32 %v1296, %v1300
        %vm1302 = vweird.f32 %v1217
        %vm1303 = vweird.f32 %v1296
        %vm1304 = vmor %vm1302, %vm1303
        %v1305 = vsel %vm1304, %v1296, %v1301
        %v1306 = vrsqrt.pop %v1218
        %v1307 = vmul.f32 %v1306, %v1218
        %v1308 = vmul.f32 %v1307, %v1306
        %v1309 = vmul.f32 0.5, %v1308
        %v1310 = vsub.f32 1.5, %v1309
        %v1311 = vmul.f32 %v1306, %v1310
        %vm1312 = vweird.f32 %v1218
        %vm1313 = vweird.f32 %v1306
        %vm1314 = vmor %vm1312, %vm1313
        %v1315 = vsel %vm1314, %v1306, %v1311
        %v1316 = vrsqrt.pop %v1219
        %v1317 = vmul.f32 %v1316, %v1219
        %v1318 = vmul.f32 %v1317, %v1316
        %v1319 = vmul.f32 0.5, %v1318
        %v1320 = vsub.f32 1.5, %v1319
        %v1321 = vmul.f32 %v1316, %v1320
        %vm1322 = vweird.f32 %v1219
        %vm1323 = vweird.f32 %v1316
        %vm1324 = vmor %vm1322, %vm1323
        %v1325 = vsel %vm1324, %v1316, %v1321
        %v1326 = vrsqrt.pop %v1220
        %v1327 = vmul.f32 %v1326, %v1220
        %v1328 = vmul.f32 %v1327, %v1326
        %v1329 = vmul.f32 0.5, %v1328
        %v1330 = vsub.f32 1.5, %v1329
        %v1331 = vmul.f32 %v1326, %v1330
        %vm1332 = vweird.f32 %v1220
        %vm1333 = vweird.f32 %v1326
        %vm1334 = vmor %vm1332, %vm1333
        %v1335 = vsel %vm1334, %v1326, %v1331
        %v1336 = vrsqrt.pop %v1221
        %v1337 = vmul.f32 %v1336, %v1221
        %v1338 = vmul.f32 %v1337, %v1336
        %v1339 = vmul.f32 0.5, %v1338
        %v1340 = vsub.f32 1.5, %v1339
        %v1341 = vmul.f32 %v1336, %v1340
        %vm1342 = vweird.f32 %v1221
        %vm1343 = vweird.f32 %v1336
        %vm1344 = vmor %vm1342, %vm1343
        %v1345 = vsel %vm1344, %v1336, %v1341
        %v1346 = vrsqrt.pop %v1222
        %v1347 = vmul.f32 %v1346, %v1222
        %v1348 = vmul.f32 %v1347, %v1346
        %v1349 = vmul.f32 0.5, %v1348
        %v1350 = vsub.f32 1.5, %v1349
        %v1351 = vmul.f32 %v1346, %v1350
        %vm1352 = vweird.f32 %v1222
        %vm1353 = vweird.f32 %v1346
        %vm1354 = vmor %vm1352, %vm1353
        %v1355 = vsel %vm1354, %v1346, %v1351
        %v1356 = vrsqrt.pop %v1223
        %v1357 = vmul.f32 %v1356, %v1223
        %v1358 = vmul.f32 %v1357, %v1356
        %v1359 = vmul.f32 0.5, %v1358
        %v1360 = vsub.f32 1.5, %v1359
        %v1361 = vmul.f32 %v1356, %v1360
        %vm1362 = vweird.f32 %v1223
        %vm1363 = vweird.f32 %v1356
        %vm1364 = vmor %vm1362, %vm1363
        %v1365 = vsel %vm1364, %v1356, %v1361
        %v1366 = vrsqrt.pop %v1224
        %v1367 = vmul.f32 %v1366, %v1224
        %v1368 = vmul.f32 %v1367, %v1366
        %v1369 = vmul.f32 0.5, %v1368
        %v1370 = vsub.f32 1.5, %v1369
        %v1371 = vmul.f32 %v1366, %v1370
        %vm1372 = vweird.f32 %v1224
        %vm1373 = vweird.f32 %v1366
        %vm1374 = vmor %vm1372, %vm1373
        %v1375 = vsel %vm1374, %v1366, %v1371
        %v1376 = vrsqrt.pop %v1225
        %v1377 = vmul.f32 %v1376, %v1225
        %v1378 = vmul.f32 %v1377, %v1376
        %v1379 = vmul.f32 0.5, %v1378
        %v1380 = vsub.f32 1.5, %v1379
        %v1381 = vmul.f32 %v1376, %v1380
        %vm1382 = vweird.f32 %v1225
        %vm1383 = vweird.f32 %v1376
        %vm1384 = vmor %vm1382, %vm1383
        %v1385 = vsel %vm1384, %v1376, %v1381
        %v1386 = vmul.f32 %v1194, %v1235
        %v1387 = vmul.f32 %v1195, %v1245
        %v1388 = vmul.f32 %v1196, %v1255
        %v1389 = vmul.f32 %v1197, %v1265
        %v1390 = vmul.f32 %v1198, %v1275
        %v1391 = vmul.f32 %v1199, %v1285
        %v1392 = vmul.f32 %v1200, %v1295
        %v1393 = vmul.f32 %v1201, %v1305
        %v1394 = vmul.f32 %v1202, %v1315
        %v1395 = vmul.f32 %v1203, %v1325
        %v1396 = vmul.f32 %v1204, %v1335
        %v1397 = vmul.f32 %v1205, %v1345
        %v1398 = vmul.f32 %v1206, %v1355
        %v1399 = vmul.f32 %v1207, %v1365
        %v1400 = vmul.f32 %v1208, %v1375
        %v1401 = vmul.f32 %v1209, %v1385
        %v1402 = vperm.slane %v790, 1
        %v1403 = vmul.f32 %v1386, %v1402
        %v1404 = vmul.f32 %v1387, %v1402
        %v1405 = vmul.f32 %v1388, %v1402
        %v1406 = vmul.f32 %v1389, %v1402
        %v1407 = vmul.f32 %v1390, %v1402
        %v1408 = vmul.f32 %v1391, %v1402
        %v1409 = vmul.f32 %v1392, %v1402
        %v1410 = vmul.f32 %v1393, %v1402
        %v1411 = vmul.f32 %v1394, %v1402
        %v1412 = vmul.f32 %v1395, %v1402
        %v1413 = vmul.f32 %v1396, %v1402
        %v1414 = vmul.f32 %v1397, %v1402
        %v1415 = vmul.f32 %v1398, %v1402
        %v1416 = vmul.f32 %v1399, %v1402
        %v1417 = vmul.f32 %v1400, %v1402
        %v1418 = vmul.f32 %v1401, %v1402
        %v1419 = vperm.slane %v790, 2
        %v1420 = vadd.f32 %v1403, %v1419
        %v1421 = vadd.f32 %v1404, %v1419
        %v1422 = vadd.f32 %v1405, %v1419
        %v1423 = vadd.f32 %v1406, %v1419
        %v1424 = vadd.f32 %v1407, %v1419
        %v1425 = vadd.f32 %v1408, %v1419
        %v1426 = vadd.f32 %v1409, %v1419
        %v1427 = vadd.f32 %v1410, %v1419
        %v1428 = vadd.f32 %v1411, %v1419
        %v1429 = vadd.f32 %v1412, %v1419
        %v1430 = vadd.f32 %v1413, %v1419
        %v1431 = vadd.f32 %v1414, %v1419
        %v1432 = vadd.f32 %v1415, %v1419
        %v1433 = vadd.f32 %v1416, %v1419
        %v1434 = vadd.f32 %v1417, %v1419
        %v1435 = vadd.f32 %v1418, %v1419
        %v1436 = vmax.f32 %v1420, 0.0
        %v1437 = vmax.f32 %v1421, 0.0
        %v1438 = vmax.f32 %v1422, 0.0
        %v1439 = vmax.f32 %v1423, 0.0
        %v1440 = vmax.f32 %v1424, 0.0
        %v1441 = vmax.f32 %v1425, 0.0
        %v1442 = vmax.f32 %v1426, 0.0
        %v1443 = vmax.f32 %v1427, 0.0
        %v1444 = vmax.f32 %v1428, 0.0
        %v1445 = vmax.f32 %v1429, 0.0
        %v1446 = vmax.f32 %v1430, 0.0
        %v1447 = vmax.f32 %v1431, 0.0
        %v1448 = vmax.f32 %v1432, 0.0
        %v1449 = vmax.f32 %v1433, 0.0
        %v1450 = vmax.f32 %v1434, 0.0
        %v1451 = vmax.f32 %v1435, 0.0
        %v1452 = vld [vmem:[#allocation5] sm:$0xf]
        %v1453 = vpack.c.bf16 %v1437, %v1436
        %v1454 = vpack.c.bf16 %v1439, %v1438
        %v1455 = vpack.c.bf16 %v1441, %v1440
        %v1456 = vpack.c.bf16 %v1443, %v1442
        %v1457 = vpack.c.bf16 %v1445, %v1444
        %v1458 = vpack.c.bf16 %v1447, %v1446
        %v1459 = vpack.c.bf16 %v1449, %v1448
        %v1460 = vpack.c.bf16 %v1451, %v1450
        %v1461 = vld [vmem:[#allocation10] sm:$0xff]
        %v1462 = vld [vmem:[#allocation10 + $0x8] sm:$0xff]
        %v1463 = vld [vmem:[#allocation10 + $0x10] sm:$0xff]
        %v1464 = vld [vmem:[#allocation10 + $0x18] sm:$0xff]
        %v1465 = vld [vmem:[#allocation10 + $0x20] sm:$0xff]
        %v1466 = vld [vmem:[#allocation10 + $0x28] sm:$0xff]
        %v1467 = vld [vmem:[#allocation10 + $0x30] sm:$0xff]
        %v1468 = vld [vmem:[#allocation10 + $0x38] sm:$0xff]
        %v1469 = vld [vmem:[#allocation10 + $0x40] sm:$0xff]
        %v1470 = vld [vmem:[#allocation10 + $0x48] sm:$0xff]
        %v1471 = vld [vmem:[#allocation10 + $0x50] sm:$0xff]
        %v1472 = vld [vmem:[#allocation10 + $0x58] sm:$0xff]
        %v1473 = vld [vmem:[#allocation10 + $0x60] sm:$0xff]
        %v1474 = vld [vmem:[#allocation10 + $0x68] sm:$0xff]
        %v1475 = vld [vmem:[#allocation10 + $0x70] sm:$0xff]
        %v1476 = vld [vmem:[#allocation10 + $0x78] sm:$0xff]
        %v1478 = vperm.slane %v1452, 1
        %v1479 = vperm.slane %v1452, 3
        %v1482 = vperm.slane %v1478, 1
        %v1483 = vperm.slane %v1479, 1
        %v1500 = vunpack.c.l.b16 %v1461
        %v1501 = vunpack.c.h.b16 %v1461
        %v1502 = vunpack.c.l.b16 %v1462
        %v1503 = vunpack.c.h.b16 %v1462
        %v1504 = vunpack.c.l.b16 %v1463
        %v1505 = vunpack.c.h.b16 %v1463
        %v1506 = vunpack.c.l.b16 %v1464
        %v1507 = vunpack.c.h.b16 %v1464
        %v1508 = vunpack.c.l.b16 %v1465
        %v1509 = vunpack.c.h.b16 %v1465
        %v1510 = vunpack.c.l.b16 %v1466
        %v1511 = vunpack.c.h.b16 %v1466
        %v1512 = vunpack.c.l.b16 %v1467
        %v1513 = vunpack.c.h.b16 %v1467
        %v1514 = vunpack.c.l.b16 %v1468
        %v1515 = vunpack.c.h.b16 %v1468
        %v1516 = vunpack.c.l.b16 %v1469
        %v1517 = vunpack.c.h.b16 %v1469
        %v1518 = vunpack.c.l.b16 %v1470
        %v1519 = vunpack.c.h.b16 %v1470
        %v1520 = vunpack.c.l.b16 %v1471
        %v1521 = vunpack.c.h.b16 %v1471
        %v1522 = vunpack.c.l.b16 %v1472
        %v1523 = vunpack.c.h.b16 %v1472
        %v1524 = vunpack.c.l.b16 %v1473
        %v1525 = vunpack.c.h.b16 %v1473
        %v1526 = vunpack.c.l.b16 %v1474
        %v1527 = vunpack.c.h.b16 %v1474
        %v1528 = vunpack.c.l.b16 %v1475
        %v1529 = vunpack.c.h.b16 %v1475
        %v1530 = vunpack.c.l.b16 %v1476
        %v1531 = vunpack.c.h.b16 %v1476
        %v1532 = vpack.c.b16 %v1502, %v1500
        %v1533 = vpack.c.b16 %v1503, %v1501
        %v1534 = vpack.c.b16 %v1506, %v1504
        %v1535 = vpack.c.b16 %v1507, %v1505
        %v1536 = vpack.c.b16 %v1510, %v1508
        %v1537 = vpack.c.b16 %v1511, %v1509
        %v1538 = vpack.c.b16 %v1514, %v1512
        %v1539 = vpack.c.b16 %v1515, %v1513
        %v1540 = vpack.c.b16 %v1518, %v1516
        %v1541 = vpack.c.b16 %v1519, %v1517
        %v1542 = vpack.c.b16 %v1522, %v1520
        %v1543 = vpack.c.b16 %v1523, %v1521
        %v1544 = vpack.c.b16 %v1526, %v1524
        %v1545 = vpack.c.b16 %v1527, %v1525
        %v1546 = vpack.c.b16 %v1530, %v1528
        %v1547 = vpack.c.b16 %v1531, %v1529
        %1564 = vmatpush.bf16.msra.mxu0 %v1546
        %1565 = vmatpush.bf16.msra.mxu0 %v1544
        %1566 = vmatpush.bf16.msra.mxu0 %v1542
        %1567 = vmatpush.bf16.msra.mxu0 %v1540
        %1568 = vmatpush.bf16.msra.mxu0 %v1538
        %1569 = vmatpush.bf16.msra.mxu0 %v1536
        %1570 = vmatpush.bf16.msra.mxu0 %v1534
        %1571 = vmatpush.bf16.msra.mxu0 %v1532
        %1572 = vmatmul.bf16.gmra.mxu0 %v1453
        %v1573 = vpop.f32.mrf.mxu0
        %v1574 = vadd.f32 %v1482, %v1573
        %v1575 = vpop.f32.mrf.mxu0
        %v1576 = vadd.f32 %v1482, %v1575
        %1577 = vmatmul.bf16.gmra.mxu0 %v1454
        %v1578 = vpop.f32.mrf.mxu0
        %v1579 = vadd.f32 %v1482, %v1578
        %v1580 = vpop.f32.mrf.mxu0
        %v1581 = vadd.f32 %v1482, %v1580
        %1582 = vmatmul.bf16.gmra.mxu0 %v1455
        %v1583 = vpop.f32.mrf.mxu0
        %v1584 = vadd.f32 %v1482, %v1583
        %v1585 = vpop.f32.mrf.mxu0
        %v1586 = vadd.f32 %v1482, %v1585
        %1587 = vmatmul.bf16.gmra.mxu0 %v1456
        %v1588 = vpop.f32.mrf.mxu0
        %v1589 = vadd.f32 %v1482, %v1588
        %v1590 = vpop.f32.mrf.mxu0
        %v1591 = vadd.f32 %v1482, %v1590
        %1592 = vmatmul.bf16.gmra.mxu0 %v1457
        %v1593 = vpop.f32.mrf.mxu0
        %v1594 = vadd.f32 %v1482, %v1593
        %v1595 = vpop.f32.mrf.mxu0
        %v1596 = vadd.f32 %v1482, %v1595
        %1597 = vmatmul.bf16.gmra.mxu0 %v1458
        %v1598 = vpop.f32.mrf.mxu0
        %v1599 = vadd.f32 %v1482, %v1598
        %v1600 = vpop.f32.mrf.mxu0
        %v1601 = vadd.f32 %v1482, %v1600
        %1602 = vmatmul.bf16.gmra.mxu0 %v1459
        %v1603 = vpop.f32.mrf.mxu0
        %v1604 = vadd.f32 %v1482, %v1603
        %v1605 = vpop.f32.mrf.mxu0
        %v1606 = vadd.f32 %v1482, %v1605
        %1607 = vmatmul.bf16.gmra.mxu0 %v1460
        %v1608 = vpop.f32.mrf.mxu0
        %v1609 = vadd.f32 %v1482, %v1608
        %v1610 = vpop.f32.mrf.mxu0
        %v1611 = vadd.f32 %v1482, %v1610
        %1612 = vdwg.mxu0
        %1613 = vmatpush.bf16.msra.mxu0 %v1547
        %1614 = vmatpush.bf16.msra.mxu0 %v1545
        %1615 = vmatpush.bf16.msra.mxu0 %v1543
        %1616 = vmatpush.bf16.msra.mxu0 %v1541
        %1617 = vmatpush.bf16.msra.mxu0 %v1539
        %1618 = vmatpush.bf16.msra.mxu0 %v1537
        %1619 = vmatpush.bf16.msra.mxu0 %v1535
        %1620 = vmatpush.bf16.msra.mxu0 %v1533
        %1621 = vmatmul.bf16.gmra.mxu0 %v1453
        %v1622 = vpop.f32.mrf.mxu0
        %v1623 = vadd.f32 %v1483, %v1622
        %v1624 = vpop.f32.mrf.mxu0
        %v1625 = vadd.f32 %v1483, %v1624
        %1626 = vmatmul.bf16.gmra.mxu0 %v1454
        %v1627 = vpop.f32.mrf.mxu0
        %v1628 = vadd.f32 %v1483, %v1627
        %v1629 = vpop.f32.mrf.mxu0
        %v1630 = vadd.f32 %v1483, %v1629
        %1631 = vmatmul.bf16.gmra.mxu0 %v1455
        %v1632 = vpop.f32.mrf.mxu0
        %v1633 = vadd.f32 %v1483, %v1632
        %v1634 = vpop.f32.mrf.mxu0
        %v1635 = vadd.f32 %v1483, %v1634
        %1636 = vmatmul.bf16.gmra.mxu0 %v1456
        %v1637 = vpop.f32.mrf.mxu0
        %v1638 = vadd.f32 %v1483, %v1637
        %v1639 = vpop.f32.mrf.mxu0
        %v1640 = vadd.f32 %v1483, %v1639
        %1641 = vmatmul.bf16.gmra.mxu0 %v1457
        %v1642 = vpop.f32.mrf.mxu0
        %v1643 = vadd.f32 %v1483, %v1642
        %v1644 = vpop.f32.mrf.mxu0
        %v1645 = vadd.f32 %v1483, %v1644
        %1646 = vmatmul.bf16.gmra.mxu0 %v1458
        %v1647 = vpop.f32.mrf.mxu0
        %v1648 = vadd.f32 %v1483, %v1647
        %v1649 = vpop.f32.mrf.mxu0
        %v1650 = vadd.f32 %v1483, %v1649
        %1651 = vmatmul.bf16.gmra.mxu0 %v1459
        %v1652 = vpop.f32.mrf.mxu0
        %v1653 = vadd.f32 %v1483, %v1652
        %v1654 = vpop.f32.mrf.mxu0
        %v1655 = vadd.f32 %v1483, %v1654
        %1656 = vmatmul.bf16.gmra.mxu0 %v1460
        %v1657 = vpop.f32.mrf.mxu0
        %v1658 = vadd.f32 %v1483, %v1657
        %v1659 = vpop.f32.mrf.mxu0
        %v1660 = vadd.f32 %v1483, %v1659
        %1661 = vdwg.mxu0
        %v1662 = vxor.u32 %v1574, 2147483648
        %v1663 = vxor.u32 %v1623, 2147483648
        %v1664 = vxor.u32 %v1576, 2147483648
        %v1665 = vxor.u32 %v1625, 2147483648
        %v1666 = vxor.u32 %v1579, 2147483648
        %v1667 = vxor.u32 %v1628, 2147483648
        %v1668 = vxor.u32 %v1581, 2147483648
        %v1669 = vxor.u32 %v1630, 2147483648
        %v1670 = vxor.u32 %v1584, 2147483648
        %v1671 = vxor.u32 %v1633, 2147483648
        %v1672 = vxor.u32 %v1586, 2147483648
        %v1673 = vxor.u32 %v1635, 2147483648
        %v1674 = vxor.u32 %v1589, 2147483648
        %v1675 = vxor.u32 %v1638, 2147483648
        %v1676 = vxor.u32 %v1591, 2147483648
        %v1677 = vxor.u32 %v1640, 2147483648
        %v1678 = vxor.u32 %v1594, 2147483648
        %v1679 = vxor.u32 %v1643, 2147483648
        %v1680 = vxor.u32 %v1596, 2147483648
        %v1681 = vxor.u32 %v1645, 2147483648
        %v1682 = vxor.u32 %v1599, 2147483648
        %v1683 = vxor.u32 %v1648, 2147483648
        %v1684 = vxor.u32 %v1601, 2147483648
        %v1685 = vxor.u32 %v1650, 2147483648
        %v1686 = vxor.u32 %v1604, 2147483648
        %v1687 = vxor.u32 %v1653, 2147483648
        %v1688 = vxor.u32 %v1606, 2147483648
        %v1689 = vxor.u32 %v1655, 2147483648
        %v1690 = vxor.u32 %v1609, 2147483648
        %v1691 = vxor.u32 %v1658, 2147483648
        %v1692 = vxor.u32 %v1611, 2147483648
        %v1693 = vxor.u32 %v1660, 2147483648
        %v1694 = vmul.f32 %v1662, 1.442695
        %v1695 = vpow.pop %v1694
        %v1696 = vmul.f32 %v1663, 1.442695
        %v1697 = vpow.pop %v1696
        %v1698 = vmul.f32 %v1664, 1.442695
        %v1699 = vpow.pop %v1698
        %v1700 = vmul.f32 %v1665, 1.442695
        %v1701 = vpow.pop %v1700
        %v1702 = vmul.f32 %v1666, 1.442695
        %v1703 = vpow.pop %v1702
        %v1704 = vmul.f32 %v1667, 1.442695
        %v1705 = vpow.pop %v1704
        %v1706 = vmul.f32 %v1668, 1.442695
        %v1707 = vpow.pop %v1706
        %v1708 = vmul.f32 %v1669, 1.442695
        %v1709 = vpow.pop %v1708
        %v1710 = vmul.f32 %v1670, 1.442695
        %v1711 = vpow.pop %v1710
        %v1712 = vmul.f32 %v1671, 1.442695
        %v1713 = vpow.pop %v1712
        %v1714 = vmul.f32 %v1672, 1.442695
        %v1715 = vpow.pop %v1714
        %v1716 = vmul.f32 %v1673, 1.442695
        %v1717 = vpow.pop %v1716
        %v1718 = vmul.f32 %v1674, 1.442695
        %v1719 = vpow.pop %v1718
        %v1720 = vmul.f32 %v1675, 1.442695
        %v1721 = vpow.pop %v1720
        %v1722 = vmul.f32 %v1676, 1.442695
        %v1723 = vpow.pop %v1722
        %v1724 = vmul.f32 %v1677, 1.442695
        %v1725 = vpow.pop %v1724
        %v1726 = vmul.f32 %v1678, 1.442695
        %v1727 = vpow.pop %v1726
        %v1728 = vmul.f32 %v1679, 1.442695
        %v1729 = vpow.pop %v1728
        %v1730 = vmul.f32 %v1680, 1.442695
        %v1731 = vpow.pop %v1730
        %v1732 = vmul.f32 %v1681, 1.442695
        %v1733 = vpow.pop %v1732
        %v1734 = vmul.f32 %v1682, 1.442695
        %v1735 = vpow.pop %v1734
        %v1736 = vmul.f32 %v1683, 1.442695
        %v1737 = vpow.pop %v1736
        %v1738 = vmul.f32 %v1684, 1.442695
        %v1739 = vpow.pop %v1738
        %v1740 = vmul.f32 %v1685, 1.442695
        %v1741 = vpow.pop %v1740
        %v1742 = vmul.f32 %v1686, 1.442695
        %v1743 = vpow.pop %v1742
        %v1744 = vmul.f32 %v1687, 1.442695
        %v1745 = vpow.pop %v1744
        %v1746 = vmul.f32 %v1688, 1.442695
        %v1747 = vpow.pop %v1746
        %v1748 = vmul.f32 %v1689, 1.442695
        %v1749 = vpow.pop %v1748
        %v1750 = vmul.f32 %v1690, 1.442695
        %v1751 = vpow.pop %v1750
        %v1752 = vmul.f32 %v1691, 1.442695
        %v1753 = vpow.pop %v1752
        %v1754 = vmul.f32 %v1692, 1.442695
        %v1755 = vpow.pop %v1754
        %v1756 = vmul.f32 %v1693, 1.442695
        %v1757 = vpow.pop %v1756
        %v1758 = vadd.f32 %v1695, 1.0
        %v1759 = vadd.f32 %v1697, 1.0
        %v1760 = vadd.f32 %v1699, 1.0
        %v1761 = vadd.f32 %v1701, 1.0
        %v1762 = vadd.f32 %v1703, 1.0
        %v1763 = vadd.f32 %v1705, 1.0
        %v1764 = vadd.f32 %v1707, 1.0
        %v1765 = vadd.f32 %v1709, 1.0
        %v1766 = vadd.f32 %v1711, 1.0
        %v1767 = vadd.f32 %v1713, 1.0
        %v1768 = vadd.f32 %v1715, 1.0
        %v1769 = vadd.f32 %v1717, 1.0
        %v1770 = vadd.f32 %v1719, 1.0
        %v1771 = vadd.f32 %v1721, 1.0
        %v1772 = vadd.f32 %v1723, 1.0
        %v1773 = vadd.f32 %v1725, 1.0
        %v1774 = vadd.f32 %v1727, 1.0
        %v1775 = vadd.f32 %v1729, 1.0
        %v1776 = vadd.f32 %v1731, 1.0
        %v1777 = vadd.f32 %v1733, 1.0
        %v1778 = vadd.f32 %v1735, 1.0
        %v1779 = vadd.f32 %v1737, 1.0
        %v1780 = vadd.f32 %v1739, 1.0
        %v1781 = vadd.f32 %v1741, 1.0
        %v1782 = vadd.f32 %v1743, 1.0
        %v1783 = vadd.f32 %v1745, 1.0
        %v1784 = vadd.f32 %v1747, 1.0
        %v1785 = vadd.f32 %v1749, 1.0
        %v1786 = vadd.f32 %v1751, 1.0
        %v1787 = vadd.f32 %v1753, 1.0
        %v1788 = vadd.f32 %v1755, 1.0
        %v1789 = vadd.f32 %v1757, 1.0
        %v1790 = vrcp.pop %v1758
        %v1791 = vmul.f32 %v1758, %v1790
        %v1792 = vsub.f32 1.0, %v1791
        %v1793 = vmul.f32 %v1790, %v1792
        %v1794 = vadd.f32 %v1790, %v1793
        %vm1795 = vweird.f32 %v1758
        %vm1796 = vweird.f32 %v1790
        %vm1797 = vmor %vm1795, %vm1796
        %v1798 = vsel %vm1797, %v1790, %v1794
        %v1799 = vand.u32 2147483647, %v1758
        %vm1800 = vcmp.eq.f32.partialorder %v1799, 8.507059e+37
        %v1801 = vand.u32 %v1758, 2147483648
        %v1802 = vor.u32 1.1754944e-38, %v1801
        %v1803 = vsel %vm1800, %v1802, %v1798
        %v1804 = vmul.f32 1.0, %v1803
        %v1805 = vrcp.pop %v1759
        %v1806 = vmul.f32 %v1759, %v1805
        %v1807 = vsub.f32 1.0, %v1806
        %v1808 = vmul.f32 %v1805, %v1807
        %v1809 = vadd.f32 %v1805, %v1808
        %vm1810 = vweird.f32 %v1759
        %vm1811 = vweird.f32 %v1805
        %vm1812 = vmor %vm1810, %vm1811
        %v1813 = vsel %vm1812, %v1805, %v1809
        %v1814 = vand.u32 2147483647, %v1759
        %vm1815 = vcmp.eq.f32.partialorder %v1814, 8.507059e+37
        %v1816 = vand.u32 %v1759, 2147483648
        %v1817 = vor.u32 1.1754944e-38, %v1816
        %v1818 = vsel %vm1815, %v1817, %v1813
        %v1819 = vmul.f32 1.0, %v1818
        %v1820 = vrcp.pop %v1760
        %v1821 = vmul.f32 %v1760, %v1820
        %v1822 = vsub.f32 1.0, %v1821
        %v1823 = vmul.f32 %v1820, %v1822
        %v1824 = vadd.f32 %v1820, %v1823
        %vm1825 = vweird.f32 %v1760
        %vm1826 = vweird.f32 %v1820
        %vm1827 = vmor %vm1825, %vm1826
        %v1828 = vsel %vm1827, %v1820, %v1824
        %v1829 = vand.u32 2147483647, %v1760
        %vm1830 = vcmp.eq.f32.partialorder %v1829, 8.507059e+37
        %v1831 = vand.u32 %v1760, 2147483648
        %v1832 = vor.u32 1.1754944e-38, %v1831
        %v1833 = vsel %vm1830, %v1832, %v1828
        %v1834 = vmul.f32 1.0, %v1833
        %v1835 = vrcp.pop %v1761
        %v1836 = vmul.f32 %v1761, %v1835
        %v1837 = vsub.f32 1.0, %v1836
        %v1838 = vmul.f32 %v1835, %v1837
        %v1839 = vadd.f32 %v1835, %v1838
        %vm1840 = vweird.f32 %v1761
        %vm1841 = vweird.f32 %v1835
        %vm1842 = vmor %vm1840, %vm1841
        %v1843 = vsel %vm1842, %v1835, %v1839
        %v1844 = vand.u32 2147483647, %v1761
        %vm1845 = vcmp.eq.f32.partialorder %v1844, 8.507059e+37
        %v1846 = vand.u32 %v1761, 2147483648
        %v1847 = vor.u32 1.1754944e-38, %v1846
        %v1848 = vsel %vm1845, %v1847, %v1843
        %v1849 = vmul.f32 1.0, %v1848
        %v1850 = vrcp.pop %v1762
        %v1851 = vmul.f32 %v1762, %v1850
        %v1852 = vsub.f32 1.0, %v1851
        %v1853 = vmul.f32 %v1850, %v1852
        %v1854 = vadd.f32 %v1850, %v1853
        %vm1855 = vweird.f32 %v1762
        %vm1856 = vweird.f32 %v1850
        %vm1857 = vmor %vm1855, %vm1856
        %v1858 = vsel %vm1857, %v1850, %v1854
        %v1859 = vand.u32 2147483647, %v1762
        %vm1860 = vcmp.eq.f32.partialorder %v1859, 8.507059e+37
        %v1861 = vand.u32 %v1762, 2147483648
        %v1862 = vor.u32 1.1754944e-38, %v1861
        %v1863 = vsel %vm1860, %v1862, %v1858
        %v1864 = vmul.f32 1.0, %v1863
        %v1865 = vrcp.pop %v1763
        %v1866 = vmul.f32 %v1763, %v1865
        %v1867 = vsub.f32 1.0, %v1866
        %v1868 = vmul.f32 %v1865, %v1867
        %v1869 = vadd.f32 %v1865, %v1868
        %vm1870 = vweird.f32 %v1763
        %vm1871 = vweird.f32 %v1865
        %vm1872 = vmor %vm1870, %vm1871
        %v1873 = vsel %vm1872, %v1865, %v1869
        %v1874 = vand.u32 2147483647, %v1763
        %vm1875 = vcmp.eq.f32.partialorder %v1874, 8.507059e+37
        %v1876 = vand.u32 %v1763, 2147483648
        %v1877 = vor.u32 1.1754944e-38, %v1876
        %v1878 = vsel %vm1875, %v1877, %v1873
        %v1879 = vmul.f32 1.0, %v1878
        %v1880 = vrcp.pop %v1764
        %v1881 = vmul.f32 %v1764, %v1880
        %v1882 = vsub.f32 1.0, %v1881
        %v1883 = vmul.f32 %v1880, %v1882
        %v1884 = vadd.f32 %v1880, %v1883
        %vm1885 = vweird.f32 %v1764
        %vm1886 = vweird.f32 %v1880
        %vm1887 = vmor %vm1885, %vm1886
        %v1888 = vsel %vm1887, %v1880, %v1884
        %v1889 = vand.u32 2147483647, %v1764
        %vm1890 = vcmp.eq.f32.partialorder %v1889, 8.507059e+37
        %v1891 = vand.u32 %v1764, 2147483648
        %v1892 = vor.u32 1.1754944e-38, %v1891
        %v1893 = vsel %vm1890, %v1892, %v1888
        %v1894 = vmul.f32 1.0, %v1893
        %v1895 = vrcp.pop %v1765
        %v1896 = vmul.f32 %v1765, %v1895
        %v1897 = vsub.f32 1.0, %v1896
        %v1898 = vmul.f32 %v1895, %v1897
        %v1899 = vadd.f32 %v1895, %v1898
        %vm1900 = vweird.f32 %v1765
        %vm1901 = vweird.f32 %v1895
        %vm1902 = vmor %vm1900, %vm1901
        %v1903 = vsel %vm1902, %v1895, %v1899
        %v1904 = vand.u32 2147483647, %v1765
        %vm1905 = vcmp.eq.f32.partialorder %v1904, 8.507059e+37
        %v1906 = vand.u32 %v1765, 2147483648
        %v1907 = vor.u32 1.1754944e-38, %v1906
        %v1908 = vsel %vm1905, %v1907, %v1903
        %v1909 = vmul.f32 1.0, %v1908
        %v1910 = vrcp.pop %v1766
        %v1911 = vmul.f32 %v1766, %v1910
        %v1912 = vsub.f32 1.0, %v1911
        %v1913 = vmul.f32 %v1910, %v1912
        %v1914 = vadd.f32 %v1910, %v1913
        %vm1915 = vweird.f32 %v1766
        %vm1916 = vweird.f32 %v1910
        %vm1917 = vmor %vm1915, %vm1916
        %v1918 = vsel %vm1917, %v1910, %v1914
        %v1919 = vand.u32 2147483647, %v1766
        %vm1920 = vcmp.eq.f32.partialorder %v1919, 8.507059e+37
        %v1921 = vand.u32 %v1766, 2147483648
        %v1922 = vor.u32 1.1754944e-38, %v1921
        %v1923 = vsel %vm1920, %v1922, %v1918
        %v1924 = vmul.f32 1.0, %v1923
        %v1925 = vrcp.pop %v1767
        %v1926 = vmul.f32 %v1767, %v1925
        %v1927 = vsub.f32 1.0, %v1926
        %v1928 = vmul.f32 %v1925, %v1927
        %v1929 = vadd.f32 %v1925, %v1928
        %vm1930 = vweird.f32 %v1767
        %vm1931 = vweird.f32 %v1925
        %vm1932 = vmor %vm1930, %vm1931
        %v1933 = vsel %vm1932, %v1925, %v1929
        %v1934 = vand.u32 2147483647, %v1767
        %vm1935 = vcmp.eq.f32.partialorder %v1934, 8.507059e+37
        %v1936 = vand.u32 %v1767, 2147483648
        %v1937 = vor.u32 1.1754944e-38, %v1936
        %v1938 = vsel %vm1935, %v1937, %v1933
        %v1939 = vmul.f32 1.0, %v1938
        %v1940 = vrcp.pop %v1768
        %v1941 = vmul.f32 %v1768, %v1940
        %v1942 = vsub.f32 1.0, %v1941
        %v1943 = vmul.f32 %v1940, %v1942
        %v1944 = vadd.f32 %v1940, %v1943
        %vm1945 = vweird.f32 %v1768
        %vm1946 = vweird.f32 %v1940
        %vm1947 = vmor %vm1945, %vm1946
        %v1948 = vsel %vm1947, %v1940, %v1944
        %v1949 = vand.u32 2147483647, %v1768
        %vm1950 = vcmp.eq.f32.partialorder %v1949, 8.507059e+37
        %v1951 = vand.u32 %v1768, 2147483648
        %v1952 = vor.u32 1.1754944e-38, %v1951
        %v1953 = vsel %vm1950, %v1952, %v1948
        %v1954 = vmul.f32 1.0, %v1953
        %v1955 = vrcp.pop %v1769
        %v1956 = vmul.f32 %v1769, %v1955
        %v1957 = vsub.f32 1.0, %v1956
        %v1958 = vmul.f32 %v1955, %v1957
        %v1959 = vadd.f32 %v1955, %v1958
        %vm1960 = vweird.f32 %v1769
        %vm1961 = vweird.f32 %v1955
        %vm1962 = vmor %vm1960, %vm1961
        %v1963 = vsel %vm1962, %v1955, %v1959
        %v1964 = vand.u32 2147483647, %v1769
        %vm1965 = vcmp.eq.f32.partialorder %v1964, 8.507059e+37
        %v1966 = vand.u32 %v1769, 2147483648
        %v1967 = vor.u32 1.1754944e-38, %v1966
        %v1968 = vsel %vm1965, %v1967, %v1963
        %v1969 = vmul.f32 1.0, %v1968
        %v1970 = vrcp.pop %v1770
        %v1971 = vmul.f32 %v1770, %v1970
        %v1972 = vsub.f32 1.0, %v1971
        %v1973 = vmul.f32 %v1970, %v1972
        %v1974 = vadd.f32 %v1970, %v1973
        %vm1975 = vweird.f32 %v1770
        %vm1976 = vweird.f32 %v1970
        %vm1977 = vmor %vm1975, %vm1976
        %v1978 = vsel %vm1977, %v1970, %v1974
        %v1979 = vand.u32 2147483647, %v1770
        %vm1980 = vcmp.eq.f32.partialorder %v1979, 8.507059e+37
        %v1981 = vand.u32 %v1770, 2147483648
        %v1982 = vor.u32 1.1754944e-38, %v1981
        %v1983 = vsel %vm1980, %v1982, %v1978
        %v1984 = vmul.f32 1.0, %v1983
        %v1985 = vrcp.pop %v1771
        %v1986 = vmul.f32 %v1771, %v1985
        %v1987 = vsub.f32 1.0, %v1986
        %v1988 = vmul.f32 %v1985, %v1987
        %v1989 = vadd.f32 %v1985, %v1988
        %vm1990 = vweird.f32 %v1771
        %vm1991 = vweird.f32 %v1985
        %vm1992 = vmor %vm1990, %vm1991
        %v1993 = vsel %vm1992, %v1985, %v1989
        %v1994 = vand.u32 2147483647, %v1771
        %vm1995 = vcmp.eq.f32.partialorder %v1994, 8.507059e+37
        %v1996 = vand.u32 %v1771, 2147483648
        %v1997 = vor.u32 1.1754944e-38, %v1996
        %v1998 = vsel %vm1995, %v1997, %v1993
        %v1999 = vmul.f32 1.0, %v1998
        %v2000 = vrcp.pop %v1772
        %v2001 = vmul.f32 %v1772, %v2000
        %v2002 = vsub.f32 1.0, %v2001
        %v2003 = vmul.f32 %v2000, %v2002
        %v2004 = vadd.f32 %v2000, %v2003
        %vm2005 = vweird.f32 %v1772
        %vm2006 = vweird.f32 %v2000
        %vm2007 = vmor %vm2005, %vm2006
        %v2008 = vsel %vm2007, %v2000, %v2004
        %v2009 = vand.u32 2147483647, %v1772
        %vm2010 = vcmp.eq.f32.partialorder %v2009, 8.507059e+37
        %v2011 = vand.u32 %v1772, 2147483648
        %v2012 = vor.u32 1.1754944e-38, %v2011
        %v2013 = vsel %vm2010, %v2012, %v2008
        %v2014 = vmul.f32 1.0, %v2013
        %v2015 = vrcp.pop %v1773
        %v2016 = vmul.f32 %v1773, %v2015
        %v2017 = vsub.f32 1.0, %v2016
        %v2018 = vmul.f32 %v2015, %v2017
        %v2019 = vadd.f32 %v2015, %v2018
        %vm2020 = vweird.f32 %v1773
        %vm2021 = vweird.f32 %v2015
        %vm2022 = vmor %vm2020, %vm2021
        %v2023 = vsel %vm2022, %v2015, %v2019
        %v2024 = vand.u32 2147483647, %v1773
        %vm2025 = vcmp.eq.f32.partialorder %v2024, 8.507059e+37
        %v2026 = vand.u32 %v1773, 2147483648
        %v2027 = vor.u32 1.1754944e-38, %v2026
        %v2028 = vsel %vm2025, %v2027, %v2023
        %v2029 = vmul.f32 1.0, %v2028
        %v2030 = vrcp.pop %v1774
        %v2031 = vmul.f32 %v1774, %v2030
        %v2032 = vsub.f32 1.0, %v2031
        %v2033 = vmul.f32 %v2030, %v2032
        %v2034 = vadd.f32 %v2030, %v2033
        %vm2035 = vweird.f32 %v1774
        %vm2036 = vweird.f32 %v2030
        %vm2037 = vmor %vm2035, %vm2036
        %v2038 = vsel %vm2037, %v2030, %v2034
        %v2039 = vand.u32 2147483647, %v1774
        %vm2040 = vcmp.eq.f32.partialorder %v2039, 8.507059e+37
        %v2041 = vand.u32 %v1774, 2147483648
        %v2042 = vor.u32 1.1754944e-38, %v2041
        %v2043 = vsel %vm2040, %v2042, %v2038
        %v2044 = vmul.f32 1.0, %v2043
        %v2045 = vrcp.pop %v1775
        %v2046 = vmul.f32 %v1775, %v2045
        %v2047 = vsub.f32 1.0, %v2046
        %v2048 = vmul.f32 %v2045, %v2047
        %v2049 = vadd.f32 %v2045, %v2048
        %vm2050 = vweird.f32 %v1775
        %vm2051 = vweird.f32 %v2045
        %vm2052 = vmor %vm2050, %vm2051
        %v2053 = vsel %vm2052, %v2045, %v2049
        %v2054 = vand.u32 2147483647, %v1775
        %vm2055 = vcmp.eq.f32.partialorder %v2054, 8.507059e+37
        %v2056 = vand.u32 %v1775, 2147483648
        %v2057 = vor.u32 1.1754944e-38, %v2056
        %v2058 = vsel %vm2055, %v2057, %v2053
        %v2059 = vmul.f32 1.0, %v2058
        %v2060 = vrcp.pop %v1776
        %v2061 = vmul.f32 %v1776, %v2060
        %v2062 = vsub.f32 1.0, %v2061
        %v2063 = vmul.f32 %v2060, %v2062
        %v2064 = vadd.f32 %v2060, %v2063
        %vm2065 = vweird.f32 %v1776
        %vm2066 = vweird.f32 %v2060
        %vm2067 = vmor %vm2065, %vm2066
        %v2068 = vsel %vm2067, %v2060, %v2064
        %v2069 = vand.u32 2147483647, %v1776
        %vm2070 = vcmp.eq.f32.partialorder %v2069, 8.507059e+37
        %v2071 = vand.u32 %v1776, 2147483648
        %v2072 = vor.u32 1.1754944e-38, %v2071
        %v2073 = vsel %vm2070, %v2072, %v2068
        %v2074 = vmul.f32 1.0, %v2073
        %v2075 = vrcp.pop %v1777
        %v2076 = vmul.f32 %v1777, %v2075
        %v2077 = vsub.f32 1.0, %v2076
        %v2078 = vmul.f32 %v2075, %v2077
        %v2079 = vadd.f32 %v2075, %v2078
        %vm2080 = vweird.f32 %v1777
        %vm2081 = vweird.f32 %v2075
        %vm2082 = vmor %vm2080, %vm2081
        %v2083 = vsel %vm2082, %v2075, %v2079
        %v2084 = vand.u32 2147483647, %v1777
        %vm2085 = vcmp.eq.f32.partialorder %v2084, 8.507059e+37
        %v2086 = vand.u32 %v1777, 2147483648
        %v2087 = vor.u32 1.1754944e-38, %v2086
        %v2088 = vsel %vm2085, %v2087, %v2083
        %v2089 = vmul.f32 1.0, %v2088
        %v2090 = vrcp.pop %v1778
        %v2091 = vmul.f32 %v1778, %v2090
        %v2092 = vsub.f32 1.0, %v2091
        %v2093 = vmul.f32 %v2090, %v2092
        %v2094 = vadd.f32 %v2090, %v2093
        %vm2095 = vweird.f32 %v1778
        %vm2096 = vweird.f32 %v2090
        %vm2097 = vmor %vm2095, %vm2096
        %v2098 = vsel %vm2097, %v2090, %v2094
        %v2099 = vand.u32 2147483647, %v1778
        %vm2100 = vcmp.eq.f32.partialorder %v2099, 8.507059e+37
        %v2101 = vand.u32 %v1778, 2147483648
        %v2102 = vor.u32 1.1754944e-38, %v2101
        %v2103 = vsel %vm2100, %v2102, %v2098
        %v2104 = vmul.f32 1.0, %v2103
        %v2105 = vrcp.pop %v1779
        %v2106 = vmul.f32 %v1779, %v2105
        %v2107 = vsub.f32 1.0, %v2106
        %v2108 = vmul.f32 %v2105, %v2107
        %v2109 = vadd.f32 %v2105, %v2108
        %vm2110 = vweird.f32 %v1779
        %vm2111 = vweird.f32 %v2105
        %vm2112 = vmor %vm2110, %vm2111
        %v2113 = vsel %vm2112, %v2105, %v2109
        %v2114 = vand.u32 2147483647, %v1779
        %vm2115 = vcmp.eq.f32.partialorder %v2114, 8.507059e+37
        %v2116 = vand.u32 %v1779, 2147483648
        %v2117 = vor.u32 1.1754944e-38, %v2116
        %v2118 = vsel %vm2115, %v2117, %v2113
        %v2119 = vmul.f32 1.0, %v2118
        %v2120 = vrcp.pop %v1780
        %v2121 = vmul.f32 %v1780, %v2120
        %v2122 = vsub.f32 1.0, %v2121
        %v2123 = vmul.f32 %v2120, %v2122
        %v2124 = vadd.f32 %v2120, %v2123
        %vm2125 = vweird.f32 %v1780
        %vm2126 = vweird.f32 %v2120
        %vm2127 = vmor %vm2125, %vm2126
        %v2128 = vsel %vm2127, %v2120, %v2124
        %v2129 = vand.u32 2147483647, %v1780
        %vm2130 = vcmp.eq.f32.partialorder %v2129, 8.507059e+37
        %v2131 = vand.u32 %v1780, 2147483648
        %v2132 = vor.u32 1.1754944e-38, %v2131
        %v2133 = vsel %vm2130, %v2132, %v2128
        %v2134 = vmul.f32 1.0, %v2133
        %v2135 = vrcp.pop %v1781
        %v2136 = vmul.f32 %v1781, %v2135
        %v2137 = vsub.f32 1.0, %v2136
        %v2138 = vmul.f32 %v2135, %v2137
        %v2139 = vadd.f32 %v2135, %v2138
        %vm2140 = vweird.f32 %v1781
        %vm2141 = vweird.f32 %v2135
        %vm2142 = vmor %vm2140, %vm2141
        %v2143 = vsel %vm2142, %v2135, %v2139
        %v2144 = vand.u32 2147483647, %v1781
        %vm2145 = vcmp.eq.f32.partialorder %v2144, 8.507059e+37
        %v2146 = vand.u32 %v1781, 2147483648
        %v2147 = vor.u32 1.1754944e-38, %v2146
        %v2148 = vsel %vm2145, %v2147, %v2143
        %v2149 = vmul.f32 1.0, %v2148
        %v2150 = vrcp.pop %v1782
        %v2151 = vmul.f32 %v1782, %v2150
        %v2152 = vsub.f32 1.0, %v2151
        %v2153 = vmul.f32 %v2150, %v2152
        %v2154 = vadd.f32 %v2150, %v2153
        %vm2155 = vweird.f32 %v1782
        %vm2156 = vweird.f32 %v2150
        %vm2157 = vmor %vm2155, %vm2156
        %v2158 = vsel %vm2157, %v2150, %v2154
        %v2159 = vand.u32 2147483647, %v1782
        %vm2160 = vcmp.eq.f32.partialorder %v2159, 8.507059e+37
        %v2161 = vand.u32 %v1782, 2147483648
        %v2162 = vor.u32 1.1754944e-38, %v2161
        %v2163 = vsel %vm2160, %v2162, %v2158
        %v2164 = vmul.f32 1.0, %v2163
        %v2165 = vrcp.pop %v1783
        %v2166 = vmul.f32 %v1783, %v2165
        %v2167 = vsub.f32 1.0, %v2166
        %v2168 = vmul.f32 %v2165, %v2167
        %v2169 = vadd.f32 %v2165, %v2168
        %vm2170 = vweird.f32 %v1783
        %vm2171 = vweird.f32 %v2165
        %vm2172 = vmor %vm2170, %vm2171
        %v2173 = vsel %vm2172, %v2165, %v2169
        %v2174 = vand.u32 2147483647, %v1783
        %vm2175 = vcmp.eq.f32.partialorder %v2174, 8.507059e+37
        %v2176 = vand.u32 %v1783, 2147483648
        %v2177 = vor.u32 1.1754944e-38, %v2176
        %v2178 = vsel %vm2175, %v2177, %v2173
        %v2179 = vmul.f32 1.0, %v2178
        %v2180 = vrcp.pop %v1784
        %v2181 = vmul.f32 %v1784, %v2180
        %v2182 = vsub.f32 1.0, %v2181
        %v2183 = vmul.f32 %v2180, %v2182
        %v2184 = vadd.f32 %v2180, %v2183
        %vm2185 = vweird.f32 %v1784
        %vm2186 = vweird.f32 %v2180
        %vm2187 = vmor %vm2185, %vm2186
        %v2188 = vsel %vm2187, %v2180, %v2184
        %v2189 = vand.u32 2147483647, %v1784
        %vm2190 = vcmp.eq.f32.partialorder %v2189, 8.507059e+37
        %v2191 = vand.u32 %v1784, 2147483648
        %v2192 = vor.u32 1.1754944e-38, %v2191
        %v2193 = vsel %vm2190, %v2192, %v2188
        %v2194 = vmul.f32 1.0, %v2193
        %v2195 = vrcp.pop %v1785
        %v2196 = vmul.f32 %v1785, %v2195
        %v2197 = vsub.f32 1.0, %v2196
        %v2198 = vmul.f32 %v2195, %v2197
        %v2199 = vadd.f32 %v2195, %v2198
        %vm2200 = vweird.f32 %v1785
        %vm2201 = vweird.f32 %v2195
        %vm2202 = vmor %vm2200, %vm2201
        %v2203 = vsel %vm2202, %v2195, %v2199
        %v2204 = vand.u32 2147483647, %v1785
        %vm2205 = vcmp.eq.f32.partialorder %v2204, 8.507059e+37
        %v2206 = vand.u32 %v1785, 2147483648
        %v2207 = vor.u32 1.1754944e-38, %v2206
        %v2208 = vsel %vm2205, %v2207, %v2203
        %v2209 = vmul.f32 1.0, %v2208
        %v2210 = vrcp.pop %v1786
        %v2211 = vmul.f32 %v1786, %v2210
        %v2212 = vsub.f32 1.0, %v2211
        %v2213 = vmul.f32 %v2210, %v2212
        %v2214 = vadd.f32 %v2210, %v2213
        %vm2215 = vweird.f32 %v1786
        %vm2216 = vweird.f32 %v2210
        %vm2217 = vmor %vm2215, %vm2216
        %v2218 = vsel %vm2217, %v2210, %v2214
        %v2219 = vand.u32 2147483647, %v1786
        %vm2220 = vcmp.eq.f32.partialorder %v2219, 8.507059e+37
        %v2221 = vand.u32 %v1786, 2147483648
        %v2222 = vor.u32 1.1754944e-38, %v2221
        %v2223 = vsel %vm2220, %v2222, %v2218
        %v2224 = vmul.f32 1.0, %v2223
        %v2225 = vrcp.pop %v1787
        %v2226 = vmul.f32 %v1787, %v2225
        %v2227 = vsub.f32 1.0, %v2226
        %v2228 = vmul.f32 %v2225, %v2227
        %v2229 = vadd.f32 %v2225, %v2228
        %vm2230 = vweird.f32 %v1787
        %vm2231 = vweird.f32 %v2225
        %vm2232 = vmor %vm2230, %vm2231
        %v2233 = vsel %vm2232, %v2225, %v2229
        %v2234 = vand.u32 2147483647, %v1787
        %vm2235 = vcmp.eq.f32.partialorder %v2234, 8.507059e+37
        %v2236 = vand.u32 %v1787, 2147483648
        %v2237 = vor.u32 1.1754944e-38, %v2236
        %v2238 = vsel %vm2235, %v2237, %v2233
        %v2239 = vmul.f32 1.0, %v2238
        %v2240 = vrcp.pop %v1788
        %v2241 = vmul.f32 %v1788, %v2240
        %v2242 = vsub.f32 1.0, %v2241
        %v2243 = vmul.f32 %v2240, %v2242
        %v2244 = vadd.f32 %v2240, %v2243
        %vm2245 = vweird.f32 %v1788
        %vm2246 = vweird.f32 %v2240
        %vm2247 = vmor %vm2245, %vm2246
        %v2248 = vsel %vm2247, %v2240, %v2244
        %v2249 = vand.u32 2147483647, %v1788
        %vm2250 = vcmp.eq.f32.partialorder %v2249, 8.507059e+37
        %v2251 = vand.u32 %v1788, 2147483648
        %v2252 = vor.u32 1.1754944e-38, %v2251
        %v2253 = vsel %vm2250, %v2252, %v2248
        %v2254 = vmul.f32 1.0, %v2253
        %v2255 = vrcp.pop %v1789
        %v2256 = vmul.f32 %v1789, %v2255
        %v2257 = vsub.f32 1.0, %v2256
        %v2258 = vmul.f32 %v2255, %v2257
        %v2259 = vadd.f32 %v2255, %v2258
        %vm2260 = vweird.f32 %v1789
        %vm2261 = vweird.f32 %v2255
        %vm2262 = vmor %vm2260, %vm2261
        %v2263 = vsel %vm2262, %v2255, %v2259
        %v2264 = vand.u32 2147483647, %v1789
        %vm2265 = vcmp.eq.f32.partialorder %v2264, 8.507059e+37
        %v2266 = vand.u32 %v1789, 2147483648
        %v2267 = vor.u32 1.1754944e-38, %v2266
        %v2268 = vsel %vm2265, %v2267, %v2263
        %v2269 = vmul.f32 1.0, %v2268
        %v2270 = vxor.u32 %v1452, 2147483648
        %v2271 = vmul.f32 %v2270, 1.442695
        %v2272 = vpow.pop %v2271
        %v2273 = vadd.f32 %v2272, 1.0
        %v2274 = vrcp.pop %v2273
        %v2275 = vmul.f32 %v2273, %v2274
        %v2276 = vsub.f32 1.0, %v2275
        %v2277 = vmul.f32 %v2274, %v2276
        %v2278 = vadd.f32 %v2274, %v2277
        %vm2279 = vweird.f32 %v2273
        %vm2280 = vweird.f32 %v2274
        %vm2281 = vmor %vm2279, %vm2280
        %v2282 = vsel %vm2281, %v2274, %v2278
        %v2283 = vand.u32 2147483647, %v2273
        %vm2284 = vcmp.eq.f32.partialorder %v2283, 8.507059e+37
        %v2285 = vand.u32 %v2273, 2147483648
        %v2286 = vor.u32 1.1754944e-38, %v2285
        %v2287 = vsel %vm2284, %v2286, %v2282
        %v2288 = vmul.f32 1.0, %v2287
        %v2290 = vperm.slane %v2288, 0
        %v2291 = vperm.slane %v2288, 2
        %v2294 = vperm.slane %v2290, 0
        %v2295 = vperm.slane %v2291, 0
        %v2296 = vmul.f32 %v2294, %v1804
        %v2297 = vmul.f32 %v2295, %v1819
        %v2298 = vmul.f32 %v2294, %v1834
        %v2299 = vmul.f32 %v2295, %v1849
        %v2300 = vmul.f32 %v2294, %v1864
        %v2301 = vmul.f32 %v2295, %v1879
        %v2302 = vmul.f32 %v2294, %v1894
        %v2303 = vmul.f32 %v2295, %v1909
        %v2304 = vmul.f32 %v2294, %v1924
        %v2305 = vmul.f32 %v2295, %v1939
        %v2306 = vmul.f32 %v2294, %v1954
        %v2307 = vmul.f32 %v2295, %v1969
        %v2308 = vmul.f32 %v2294, %v1984
        %v2309 = vmul.f32 %v2295, %v1999
        %v2310 = vmul.f32 %v2294, %v2014
        %v2311 = vmul.f32 %v2295, %v2029
        %v2312 = vmul.f32 %v2294, %v2044
        %v2313 = vmul.f32 %v2295, %v2059
        %v2314 = vmul.f32 %v2294, %v2074
        %v2315 = vmul.f32 %v2295, %v2089
        %v2316 = vmul.f32 %v2294, %v2104
        %v2317 = vmul.f32 %v2295, %v2119
        %v2318 = vmul.f32 %v2294, %v2134
        %v2319 = vmul.f32 %v2295, %v2149
        %v2320 = vmul.f32 %v2294, %v2164
        %v2321 = vmul.f32 %v2295, %v2179
        %v2322 = vmul.f32 %v2294, %v2194
        %v2323 = vmul.f32 %v2295, %v2209
        %v2324 = vmul.f32 %v2294, %v2224
        %v2325 = vmul.f32 %v2295, %v2239
        %v2326 = vmul.f32 %v2294, %v2254
        %v2327 = vmul.f32 %v2295, %v2269
        %v2328 = vmul.f32 %v310, %v2296
        %v2329 = vmul.f32 %v311, %v2297
        %v2330 = vmul.f32 %v312, %v2298
        %v2331 = vmul.f32 %v313, %v2299
        %v2332 = vmul.f32 %v314, %v2300
        %v2333 = vmul.f32 %v315, %v2301
        %v2334 = vmul.f32 %v316, %v2302
        %v2335 = vmul.f32 %v317, %v2303
        %v2336 = vmul.f32 %v318, %v2304
        %v2337 = vmul.f32 %v319, %v2305
        %v2338 = vmul.f32 %v320, %v2306
        %v2339 = vmul.f32 %v321, %v2307
        %v2340 = vmul.f32 %v322, %v2308
        %v2341 = vmul.f32 %v323, %v2309
        %v2342 = vmul.f32 %v324, %v2310
        %v2343 = vmul.f32 %v325, %v2311
        %v2344 = vmul.f32 %v326, %v2312
        %v2345 = vmul.f32 %v327, %v2313
        %v2346 = vmul.f32 %v328, %v2314
        %v2347 = vmul.f32 %v329, %v2315
        %v2348 = vmul.f32 %v330, %v2316
        %v2349 = vmul.f32 %v331, %v2317
        %v2350 = vmul.f32 %v332, %v2318
        %v2351 = vmul.f32 %v333, %v2319
        %v2352 = vmul.f32 %v334, %v2320
        %v2353 = vmul.f32 %v335, %v2321
        %v2354 = vmul.f32 %v336, %v2322
        %v2355 = vmul.f32 %v337, %v2323
        %v2356 = vmul.f32 %v338, %v2324
        %v2357 = vmul.f32 %v339, %v2325
        %v2358 = vmul.f32 %v340, %v2326
        %v2359 = vmul.f32 %v341, %v2327
        %2360 = vst [vmem:[%s307] sm:$0xff] %v2328
        %2361 = vst [vmem:[%s307 + $0x8] sm:$0xff] %v2329
        %2362 = vst [vmem:[%s307 + $0x10] sm:$0xff] %v2330
        %2363 = vst [vmem:[%s307 + $0x18] sm:$0xff] %v2331
        %2364 = vst [vmem:[%s307 + $0x20] sm:$0xff] %v2332
        %2365 = vst [vmem:[%s307 + $0x28] sm:$0xff] %v2333
        %2366 = vst [vmem:[%s307 + $0x30] sm:$0xff] %v2334
        %2367 = vst [vmem:[%s307 + $0x38] sm:$0xff] %v2335
        %2368 = vst [vmem:[%s307 + $0x40] sm:$0xff] %v2336
        %2369 = vst [vmem:[%s307 + $0x48] sm:$0xff] %v2337
        %2370 = vst [vmem:[%s307 + $0x50] sm:$0xff] %v2338
        %2371 = vst [vmem:[%s307 + $0x58] sm:$0xff] %v2339
        %2372 = vst [vmem:[%s307 + $0x60] sm:$0xff] %v2340
        %2373 = vst [vmem:[%s307 + $0x68] sm:$0xff] %v2341
        %2374 = vst [vmem:[%s307 + $0x70] sm:$0xff] %v2342
        %2375 = vst [vmem:[%s307 + $0x78] sm:$0xff] %v2343
        %2376 = vst [vmem:[%s307 + $0x80] sm:$0xff] %v2344
        %2377 = vst [vmem:[%s307 + $0x88] sm:$0xff] %v2345
        %2378 = vst [vmem:[%s307 + $0x90] sm:$0xff] %v2346
        %2379 = vst [vmem:[%s307 + $0x98] sm:$0xff] %v2347
        %2380 = vst [vmem:[%s307 + $0xa0] sm:$0xff] %v2348
        %2381 = vst [vmem:[%s307 + $0xa8] sm:$0xff] %v2349
        %2382 = vst [vmem:[%s307 + $0xb0] sm:$0xff] %v2350
        %2383 = vst [vmem:[%s307 + $0xb8] sm:$0xff] %v2351
        %2384 = vst [vmem:[%s307 + $0xc0] sm:$0xff] %v2352
        %2385 = vst [vmem:[%s307 + $0xc8] sm:$0xff] %v2353
        %2386 = vst [vmem:[%s307 + $0xd0] sm:$0xff] %v2354
        %2387 = vst [vmem:[%s307 + $0xd8] sm:$0xff] %v2355
        %2388 = vst [vmem:[%s307 + $0xe0] sm:$0xff] %v2356
        %2389 = vst [vmem:[%s307 + $0xe8] sm:$0xff] %v2357
        %2390 = vst [vmem:[%s307 + $0xf0] sm:$0xff] %v2358
        %2391 = vst [vmem:[%s307 + $0xf8] sm:$0xff] %v2359
        %s2392 = sand.u32 %s142, 1
        %s2393 = scalar_lea.sflag [#allocation4], %s2392
        %s2394 = sand.u32 %s142, 1
        %s2395 = smul.addr %s2394, 256
        %s2396 = scalar_lea.vmem [#allocation11], %s2395
        // Predicated region
        $region61: #{tpu_custom_call.1} parent=39 // pred_check
          %p2397 = pneg %p152
        $region62: #{tpu_custom_call.1} parent=39 // pred_check_branch
          %2399 = sbr.rel (%p2397) target = $region64
        $region63: #{tpu_custom_call.1} parent=39 // pred_region
          %s2400 = smul.u32 16, %s24
          %2402 = vsyncadd %s2393, 0
          %s2403 = smul.addr %s2400, 2
          %s2404 = smul.addr %s2403, 8
          %s2405 = scalar_lea.hbm %s5, %s2404
          %s2406 = sshll.u32 %s2396, 4
          %s2407 = int_to_ptr.vmem [resolvable:$true] %s2406
          %s2408 = sshll.u32 %s2405, 4
          %s2409 = int_to_ptr.hbm [resolvable:$true] %s2408
          %2414 = dma.vmem_to_hbm [thread:$0]  %s2407, 4096, %s2409, %s2393, 256, 256, 16
        $region64: #{tpu_custom_call.1} parent=39 // pred_fallthru
          _
      $region40: #{tpu_custom_call.1} parent=5 // pred_fallthru
        _
      %p2415 = scmp.le.s32.totalorder 2, %s19
      // Predicated region
      $region65: #{tpu_custom_call.1} parent=5 // pred_check
        %p2416 = pneg %p2415
      $region66: #{tpu_custom_call.1} parent=5 // pred_check_branch
        %2418 = sbr.rel (%p2416) target = $region68
      $region67: #{tpu_custom_call.1} parent=5 // pred_region
        %s2419 = ssub.s32 %s19, 2
        // Predicated region
        $region69: #{tpu_custom_call.1} parent=67 // pred_check
          %p2420 = pneg %p158
        $region70: #{tpu_custom_call.1} parent=67 // pred_check_branch
          %2422 = sbr.rel (%p2420) target = $region72
        $region71: #{tpu_custom_call.1} parent=67 // pred_region
          %s2423 = sand.u32 %s143, 1
          %s2424 = scalar_lea.sflag [#allocation4], %s2423
          %s2425 = sand.u32 %s143, 1
          %s2426 = smul.addr %s2425, 256
          %s2427 = scalar_lea.vmem [#allocation11], %s2426
          %2429 = dma.done %s2424, 4096
        $region72: #{tpu_custom_call.1} parent=67 // pred_fallthru
          _
      $region68: #{tpu_custom_call.1} parent=5 // pred_fallthru
        _
    $region6: #{tpu_custom_call.1} parent=1 // loop_footer
      %s23 = sadd.s32 1, %s19
    $region7: #{tpu_custom_call.1} parent=1 // loop_footer_branch
      %18 = sbr.rel target = $region3
    $region8: #{tpu_custom_call.1} parent=1 // loop_exit
      _
    %2430 = vsyncpa [#allocation3], 1
    %s2431 = scalar_lea.sflag [#allocation3], 1
    %2432 = vsyncpa %s2431, 1
    %2433 = vsyncpa [#allocation6], 1
    %2434 = vsyncpa [#allocation9], 1
    %2435 = vsyncpa [#allocation4], 1
    %s2436 = scalar_lea.sflag [#allocation4], 1
    %2437 = vsyncpa %s2436, 1

</llo_original>
